<compile_context>
chip_gen: v6e
topology: v6e:2x2x1
jax: 0.10.0
libtpu: 0.0.40
codegen_flags: <defaults>
</compile_context>

<pallas_src>
import functools

import jax
import jax.numpy as jnp
from jax import lax
from jax.experimental import pallas as pl
from jax.experimental.pallas import tpu as pltpu


def _attend_kernel(q_ref, k_ref, v_ref, o_ref, m_sc, l_sc, acc_sc, *, scale):
    """One step: G heads, one (TQ, TK) tile of the attention matrix."""
    j = pl.program_id(2)

    @pl.when(j == 0)
    def _():
        m_sc[...] = jnp.full(m_sc.shape, -jnp.inf, dtype=m_sc.dtype)
        l_sc[...] = jnp.zeros(l_sc.shape, dtype=l_sc.dtype)
        acc_sc[...] = jnp.zeros(acc_sc.shape, dtype=acc_sc.dtype)

    # Native-dtype blocks; no f32 upcast before the MXU.
    q = q_ref[...]                                   # (G, TQ, D)
    k = k_ref[...]                                   # (G, TK, D)
    v = v_ref[...]                                   # (G, TK, D)

    # Fold the softmax scale into q (cheaper: TQ*D vs TQ*TK elements).
    qs = (q * scale).astype(q.dtype)

    # sim[g, i, j] = sum_d q[g, i, d] * k[g, j, d]   (contract last dims, batch g)
    s = lax.dot_general(
        qs, k,
        dimension_numbers=(((2,), (2,)), ((0,), (0,))),
        preferred_element_type=jnp.float32)          # (G, TQ, TK) f32

    # Online (flash) softmax update.
    m_prev = m_sc[...]
    m_new = jnp.maximum(m_prev, jnp.max(s, axis=-1, keepdims=True))
    alpha = jnp.exp(m_prev - m_new)                  # rescale of previous stats
    p = jnp.exp(s - m_new)                           # (G, TQ, TK) f32

    l_sc[...] = alpha * l_sc[...] + jnp.sum(p, axis=-1, keepdims=True)
    pv = lax.dot_general(
        p.astype(v.dtype), v,                        # keep PV matmul in v.dtype
        dimension_numbers=(((2,), (1,)), ((0,), (0,))),
        preferred_element_type=jnp.float32)          # (G, TQ, D) f32
    acc_sc[...] = alpha * acc_sc[...] + pv
    m_sc[...] = m_new

    @pl.when(j == pl.num_programs(2) - 1)
    def _():
        inv_l = pl.reciprocal(l_sc[...], approx=True)    # EUP slot, co-issues
        o_ref[...] = (acc_sc[...] * inv_l).astype(o_ref.dtype)


def _largest_divisor(n, cap, multiple=1):
    """Largest divisor of n that is <= cap and a multiple of `multiple`."""
    cap = min(n, cap)
    t = cap - (cap % multiple)
    while t >= multiple:
        if n % t == 0:
            return t
        t -= multiple
    return n


def attend(q, k, v, *, scale=None, group_heads=8, q_tile=256, kv_tile=512):
    """Pallas equivalent of Attend.forward (flash=False, dropout=0.0, eval).

    q: [B, H, Nq, D], k: [B, H, Nk, D], v: [B, H, Nk, D]  -> out: [B, H, Nq, D]
    """
    B, H, Nq, D = q.shape
    Nk = k.shape[-2]
    assert k.shape == (B, H, Nk, D) and v.shape == (B, H, Nk, D)

    eff_scale = float(scale) if scale is not None else float(D) ** -0.5

    BH = B * H
    # (B, H) -> BH fold is a no-copy reshape; no N/D transpose in the wrapper.
    qf = q.reshape(BH, Nq, D)
    kf = k.reshape(BH, Nk, D)
    vf = v.reshape(BH, Nk, D)

    # G (batch, head) pairs per grid step.
    G = _largest_divisor(BH, group_heads, multiple=1)
    # Tiles obey the (8, 128) rule: multiple of 8 on the sublane dim or the
    # full extent; the lane dim is always the full D.
    TQ = Nq if Nq <= q_tile else _largest_divisor(Nq, q_tile, multiple=8)
    TK = Nk if Nk <= kv_tile else _largest_divisor(Nk, kv_tile, multiple=8)
    # TODO(synk): for very small D (<128) a lane-dense packed output layout
    # (concatenating heads on the last axis) would further reduce masked stores.

    grid = (BH // G, Nq // TQ, Nk // TK)
    kernel = functools.partial(_attend_kernel, scale=eff_scale)

    out_flat = pl.pallas_call(
        kernel,
        out_shape=jax.ShapeDtypeStruct((BH, Nq, D), q.dtype),
        grid_spec=pltpu.PrefetchScalarGridSpec(
            num_scalar_prefetch=0,
            grid=grid,
            in_specs=[
                pl.BlockSpec((G, TQ, D), lambda g, i, j: (g, i, 0)),
                pl.BlockSpec((G, TK, D), lambda g, i, j: (g, j, 0)),
                pl.BlockSpec((G, TK, D), lambda g, i, j: (g, j, 0)),
            ],
            out_specs=pl.BlockSpec((G, TQ, D), lambda g, i, j: (g, i, 0)),
            scratch_shapes=[
                pltpu.VMEM((G, TQ, 1), jnp.float32),   # running max m
                pltpu.VMEM((G, TQ, 1), jnp.float32),   # running denom l
                pltpu.VMEM((G, TQ, D), jnp.float32),   # running numerator acc
            ],
        ),
        compiler_params=pltpu.CompilerParams(
            dimension_semantics=("parallel", "parallel", "arbitrary"),
            vmem_limit_bytes=32 * 1024 * 1024,  # tiles sized to stay well under this
        ),
    )(qf, kf, vf)

    return out_flat.reshape(B, H, Nq, D)


def _attend_reference(q, k, v, *, scale=None):
    D = q.shape[-1]
    eff_scale = float(scale) if scale is not None else float(D) ** -0.5
    sim = jnp.einsum("bhid,bhjd->bhij", q.astype(jnp.float32),
                     k.astype(jnp.float32)) * eff_scale
    attn = jax.nn.softmax(sim, axis=-1)
    out = jnp.einsum("bhij,bhjd->bhid", attn, v.astype(jnp.float32))
    return out.astype(q.dtype)


if __name__ == "__main__":
    # --- small f32 case (module-default shapes) ---
    B, H, N, D = 2, 4, 16, 32  # batch, heads, seq length, head dim
    key = jax.random.PRNGKey(0)
    kq, kk, kv = jax.random.split(key, 3)
    q = jax.random.normal(kq, (B, H, N, D), dtype=jnp.float32)
    k = jax.random.normal(kk, (B, H, N, D), dtype=jnp.float32)
    v = jax.random.normal(kv, (B, H, N, D), dtype=jnp.float32)

    out = jax.block_until_ready(attend(q, k, v))        # default scale = D**-0.5
    ref = _attend_reference(q, k, v)
    assert out.shape == (B, H, N, D)
    assert jnp.allclose(out, ref, atol=2e-3, rtol=2e-3), "mismatch vs reference"

    # Explicit-scale path (self.scale provided).
    out2 = jax.block_until_ready(attend(q, k, v, scale=0.25))
    ref2 = _attend_reference(q, k, v, scale=0.25)
    assert jnp.allclose(out2, ref2, atol=2e-3, rtol=2e-3), "mismatch (scale=0.25)"

    # --- bf16 case exercising Nq/Nk tiling and the online-softmax path ---
    B2, H2, N2, D2 = 1, 2, 1024, 32
    k2q, k2k, k2v = jax.random.split(jax.random.PRNGKey(1), 3)
    q2 = jax.random.normal(k2q, (B2, H2, N2, D2), dtype=jnp.bfloat16)
    k2 = jax.random.normal(k2k, (B2, H2, N2, D2), dtype=jnp.bfloat16)
    v2 = jax.random.normal(k2v, (B2, H2, N2, D2), dtype=jnp.bfloat16)

    out3 = jax.block_until_ready(attend(q2, k2, v2))
    ref3 = _attend_reference(q2, k2, v2)
    assert out3.shape == (B2, H2, N2, D2)
    assert jnp.allclose(out3.astype(jnp.float32), ref3.astype(jnp.float32),
                        atol=3e-2, rtol=3e-2), "bf16 tiled mismatch vs reference"

    print("KERNEL_OK")
</pallas_src>

<mosaic_0001>
module attributes {stable_mosaic.version = 11 : i64} {
  func.func @_attend_kernel(%arg0: i32, %arg1: i32, %arg2: i32, %arg3: memref<8x16x32xf32, #tpu.memory_space<vmem>>, %arg4: memref<8x16x32xf32, #tpu.memory_space<vmem>>, %arg5: memref<8x16x32xf32, #tpu.memory_space<vmem>>, %arg6: memref<8x16x32xf32, #tpu.memory_space<vmem>>, %arg7: memref<8x16x1xf32, #tpu.memory_space<vmem>>, %arg8: memref<8x16x1xf32, #tpu.memory_space<vmem>>, %arg9: memref<8x16x32xf32, #tpu.memory_space<vmem>>) attributes {dimension_semantics = [#tpu.dimension_semantics<parallel>, #tpu.dimension_semantics<parallel>, #tpu.dimension_semantics<arbitrary>], iteration_bounds = array<i64: 1, 1, 1>, scalar_prefetch = 0 : i64, scratch_operands = 3 : i64, tpu.core_type = #tpu.core_type<tc>, window_params = [{transform_indices = @transform_0, window_bounds = array<i64: 8, 16, 32>}, {transform_indices = @transform_1, window_bounds = array<i64: 8, 16, 32>}, {transform_indices = @transform_2, window_bounds = array<i64: 8, 16, 32>}, {transform_indices = @transform_3, window_bounds = array<i64: 8, 16, 32>}]} {
    %c0_i32 = arith.constant 0 : i32
    %0 = arith.cmpi eq, %arg2, %c0_i32 : i32
    %1 = arith.extui %0 : i1 to i32
    %c0_i32_0 = arith.constant 0 : i32
    %2 = arith.cmpi ne, %1, %c0_i32_0 : i32
    scf.if %2 {
      %cst_33 = arith.constant 0xFF800000 : f32
      %34 = vector.broadcast %cst_33 : f32 to vector<8x16x1xf32>
      %c0_34 = arith.constant 0 : index
      %c0_35 = arith.constant 0 : index
      %c0_36 = arith.constant 0 : index
      %35 = vector.load %arg7[%c0_34, %c0_35, %c0_36] : memref<8x16x1xf32, #tpu.memory_space<vmem>>, vector<8x16x1xf32>
      tpu.vector_store %arg7[%c0_34, %c0_35, %c0_36], %34 {strides = array<i32>} : memref<8x16x1xf32, #tpu.memory_space<vmem>>, vector<8x16x1xf32>,
      %cst_37 = arith.constant 0.000000e+00 : f32
      %36 = vector.broadcast %cst_37 : f32 to vector<8x16x1xf32>
      %c0_38 = arith.constant 0 : index
      %c0_39 = arith.constant 0 : index
      %c0_40 = arith.constant 0 : index
      %37 = vector.load %arg8[%c0_38, %c0_39, %c0_40] : memref<8x16x1xf32, #tpu.memory_space<vmem>>, vector<8x16x1xf32>
      tpu.vector_store %arg8[%c0_38, %c0_39, %c0_40], %36 {strides = array<i32>} : memref<8x16x1xf32, #tpu.memory_space<vmem>>, vector<8x16x1xf32>,
      %cst_41 = arith.constant 0.000000e+00 : f32
      %38 = vector.broadcast %cst_41 : f32 to vector<8x16x32xf32>
      %c0_42 = arith.constant 0 : index
      %c0_43 = arith.constant 0 : index
      %c0_44 = arith.constant 0 : index
      %39 = vector.load %arg9[%c0_42, %c0_43, %c0_44] : memref<8x16x32xf32, #tpu.memory_space<vmem>>, vector<8x16x32xf32>
      tpu.vector_store %arg9[%c0_42, %c0_43, %c0_44], %38 {strides = array<i32>} : memref<8x16x32xf32, #tpu.memory_space<vmem>>, vector<8x16x32xf32>,
    } else {
    }
    %c0 = arith.constant 0 : index
    %c0_1 = arith.constant 0 : index
    %c0_2 = arith.constant 0 : index
    %3 = vector.load %arg3[%c0, %c0_1, %c0_2] : memref<8x16x32xf32, #tpu.memory_space<vmem>>, vector<8x16x32xf32>
    %c0_3 = arith.constant 0 : index
    %c0_4 = arith.constant 0 : index
    %c0_5 = arith.constant 0 : index
    %4 = vector.load %arg4[%c0_3, %c0_4, %c0_5] : memref<8x16x32xf32, #tpu.memory_space<vmem>>, vector<8x16x32xf32>
    %c0_6 = arith.constant 0 : index
    %c0_7 = arith.constant 0 : index
    %c0_8 = arith.constant 0 : index
    %5 = vector.load %arg5[%c0_6, %c0_7, %c0_8] : memref<8x16x32xf32, #tpu.memory_space<vmem>>, vector<8x16x32xf32>
    %cst = arith.constant 0.176776692 : f32
    %6 = vector.broadcast %cst : f32 to vector<8x16x32xf32>
    %7 = arith.mulf %3, %6 : vector<8x16x32xf32>
    %cst_9 = arith.constant dense<0.000000e+00> : vector<8x16x16xf32>
    %8 = tpu.matmul %7, %4, %cst_9 {dimension_numbers = #tpu.dot_dimension_numbers<[2], [2], [1], [1], [0, 0, 0, 1, 1, 1], [0], [0]>} : vector<8x16x32xf32>, vector<8x16x32xf32>, vector<8x16x16xf32> -> vector<8x16x16xf32>
    %c0_10 = arith.constant 0 : index
    %c0_11 = arith.constant 0 : index
    %c0_12 = arith.constant 0 : index
    %9 = vector.load %arg7[%c0_10, %c0_11, %c0_12] : memref<8x16x1xf32, #tpu.memory_space<vmem>>, vector<8x16x1xf32>
    %cst_13 = arith.constant dense<0xFF800000> : vector<8x16xf32>
    %10 = vector.multi_reduction <maximumf>, %8, %cst_13 [2] : vector<8x16x16xf32> to vector<8x16xf32>
    %11 = vector.shape_cast %10 : vector<8x16xf32> to vector<8x16x1xf32>
    %12 = arith.maximumf %9, %11 : vector<8x16x1xf32>
    %13 = arith.subf %9, %12 : vector<8x16x1xf32>
    %14 = math.exp %13 : vector<8x16x1xf32>
    %15 = vector.broadcast %12 : vector<8x16x1xf32> to vector<8x16x16xf32>
    %16 = arith.subf %8, %15 : vector<8x16x16xf32>
    %17 = math.exp %16 : vector<8x16x16xf32>
    %c0_14 = arith.constant 0 : index
    %c0_15 = arith.constant 0 : index
    %c0_16 = arith.constant 0 : index
    %18 = vector.load %arg8[%c0_14, %c0_15, %c0_16] : memref<8x16x1xf32, #tpu.memory_space<vmem>>, vector<8x16x1xf32>
    %19 = arith.mulf %14, %18 : vector<8x16x1xf32>
    %cst_17 = arith.constant dense<0.000000e+00> : vector<8x16xf32>
    %20 = vector.multi_reduction <add>, %17, %cst_17 [2] : vector<8x16x16xf32> to vector<8x16xf32>
    %21 = vector.shape_cast %20 : vector<8x16xf32> to vector<8x16x1xf32>
    %22 = arith.addf %19, %21 : vector<8x16x1xf32>
    %c0_18 = arith.constant 0 : index
    %c0_19 = arith.constant 0 : index
    %c0_20 = arith.constant 0 : index
    %23 = vector.load %arg8[%c0_18, %c0_19, %c0_20] : memref<8x16x1xf32, #tpu.memory_space<vmem>>, vector<8x16x1xf32>
    tpu.vector_store %arg8[%c0_18, %c0_19, %c0_20], %22 {strides = array<i32>} : memref<8x16x1xf32, #tpu.memory_space<vmem>>, vector<8x16x1xf32>,
    %cst_21 = arith.constant dense<0.000000e+00> : vector<8x16x32xf32>
    %24 = tpu.matmul %17, %5, %cst_21 {dimension_numbers = #tpu.dot_dimension_numbers<[2], [1], [1], [2], [0, 0, 0, 1, 1, 2], [0], [0]>} : vector<8x16x16xf32>, vector<8x16x32xf32>, vector<8x16x32xf32> -> vector<8x16x32xf32>
    %c0_22 = arith.constant 0 : index
    %c0_23 = arith.constant 0 : index
    %c0_24 = arith.constant 0 : index
    %25 = vector.load %arg9[%c0_22, %c0_23, %c0_24] : memref<8x16x32xf32, #tpu.memory_space<vmem>>, vector<8x16x32xf32>
    %26 = vector.broadcast %14 : vector<8x16x1xf32> to vector<8x16x32xf32>
    %27 = arith.mulf %26, %25 : vector<8x16x32xf32>
    %28 = arith.addf %27, %24 : vector<8x16x32xf32>
    %c0_25 = arith.constant 0 : index
    %c0_26 = arith.constant 0 : index
    %c0_27 = arith.constant 0 : index
    %29 = vector.load %arg9[%c0_25, %c0_26, %c0_27] : memref<8x16x32xf32, #tpu.memory_space<vmem>>, vector<8x16x32xf32>
    tpu.vector_store %arg9[%c0_25, %c0_26, %c0_27], %28 {strides = array<i32>} : memref<8x16x32xf32, #tpu.memory_space<vmem>>, vector<8x16x32xf32>,
    %c0_28 = arith.constant 0 : index
    %c0_29 = arith.constant 0 : index
    %c0_30 = arith.constant 0 : index
    %30 = vector.load %arg7[%c0_28, %c0_29, %c0_30] : memref<8x16x1xf32, #tpu.memory_space<vmem>>, vector<8x16x1xf32>
    tpu.vector_store %arg7[%c0_28, %c0_29, %c0_30], %12 {strides = array<i32>} : memref<8x16x1xf32, #tpu.memory_space<vmem>>, vector<8x16x1xf32>,
    %c0_i32_31 = arith.constant 0 : i32
    %31 = arith.cmpi eq, %arg2, %c0_i32_31 : i32
    %32 = arith.extui %31 : i1 to i32
    %c0_i32_32 = arith.constant 0 : i32
    %33 = arith.cmpi ne, %32, %c0_i32_32 : i32
    scf.if %33 {
      %c0_33 = arith.constant 0 : index
      %c0_34 = arith.constant 0 : index
      %c0_35 = arith.constant 0 : index
      %34 = vector.load %arg8[%c0_33, %c0_34, %c0_35] : memref<8x16x1xf32, #tpu.memory_space<vmem>>, vector<8x16x1xf32>
      %35 = tpu.reciprocal %34 {approx = true} : vector<8x16x1xf32> -> vector<8x16x1xf32>
      %c0_36 = arith.constant 0 : index
      %c0_37 = arith.constant 0 : index
      %c0_38 = arith.constant 0 : index
      %36 = vector.load %arg9[%c0_36, %c0_37, %c0_38] : memref<8x16x32xf32, #tpu.memory_space<vmem>>, vector<8x16x32xf32>
      %37 = vector.broadcast %35 : vector<8x16x1xf32> to vector<8x16x32xf32>
      %38 = arith.mulf %36, %37 : vector<8x16x32xf32>
      %c0_39 = arith.constant 0 : index
      %c0_40 = arith.constant 0 : index
      %c0_41 = arith.constant 0 : index
      %39 = vector.load %arg6[%c0_39, %c0_40, %c0_41] : memref<8x16x32xf32, #tpu.memory_space<vmem>>, vector<8x16x32xf32>
      tpu.vector_store %arg6[%c0_39, %c0_40, %c0_41], %38 {strides = array<i32>} : memref<8x16x32xf32, #tpu.memory_space<vmem>>, vector<8x16x32xf32>,
    } else {
    }
    return
  }
  func.func @transform_0(%arg0: i32, %arg1: i32, %arg2: i32) -> (i32, i32, i32) {
    %c0_i32 = arith.constant 0 : i32
    %c0_i32_0 = arith.constant 0 : i32
    return %arg0, %arg1, %c0_i32 : i32, i32, i32
  }
  func.func @transform_1(%arg0: i32, %arg1: i32, %arg2: i32) -> (i32, i32, i32) {
    %c0_i32 = arith.constant 0 : i32
    %c0_i32_0 = arith.constant 0 : i32
    return %arg0, %arg2, %c0_i32 : i32, i32, i32
  }
  func.func @transform_2(%arg0: i32, %arg1: i32, %arg2: i32) -> (i32, i32, i32) {
    %c0_i32 = arith.constant 0 : i32
    %c0_i32_0 = arith.constant 0 : i32
    return %arg0, %arg2, %c0_i32 : i32, i32, i32
  }
  func.func @transform_3(%arg0: i32, %arg1: i32, %arg2: i32) -> (i32, i32, i32) {
    %c0_i32 = arith.constant 0 : i32
    %c0_i32_0 = arith.constant 0 : i32
    return %arg0, %arg1, %c0_i32 : i32, i32, i32
  }
}

</mosaic_0001>

<llo_original>
// kernel: tpu_custom_call.1
$region0: #{tpu_custom_call.1}
  #allocation0 [shape = 'u32[]', space=smem, size = 0x4, offset = 0x4, fixed_abs, tag = 'smem constant byte address 0x4 - core index']
  #allocation1 [shape = 'u32[144,128]{1,0:T(1,128)}', space=vmem, size = 0x12000, scoped, tag = 'internal scratch']
  #allocation2 [shape = 'f32[8,16,1]{2,1,0:T(8,128)}', space=vmem, size = 0x10000, scoped, tag = 'scratch operand']
  #allocation3 [shape = 'f32[8,16,1]{2,1,0:T(8,128)}', space=vmem, size = 0x10000, scoped, tag = 'scratch operand']
  #allocation4 [shape = 'f32[8,16,32]{2,1,0:T(8,128)}', space=vmem, size = 0x10000, scoped, tag = 'scratch operand']
  %s0 = inlined_call_operand.hbm [shape: f32[8,16,32], index: 0, kind: input, shape index: {}]
  %s1 = inlined_call_operand.hbm [shape: f32[8,16,32], index: 1, kind: input, shape index: {}]
  %s2 = inlined_call_operand.hbm [shape: f32[8,16,32], index: 2, kind: input, shape index: {}]
  %s3 = inlined_call_operand.hbm [shape: f32[8,16,32], index: 3, kind: output, shape index: {}]
  %s4 = sld [smem:[#allocation0]]
  $region42: #{tpu_custom_call.1} parent=0
    _
  %s6 = ssub.s32 1, %s4
  %s7 = scalar_select 0, %s6, %s4
  $region1: #{tpu_custom_call.1} parent=0
    #allocation5 [shape = 'u8[65536]{0}', space=vmem, size = 0x10000, scoped, tag = 'input window, operand 0, single buffered']
    #allocation6 [shape = 's32[1]{0}', space=sflag, size = 0x4, scoped, tag = 'scoped memory for tpu_custom_call.1']
    #allocation7 [shape = 's32[1]{0}', space=sflag, size = 0x4, scoped, tag = 'scoped memory for tpu_custom_call.1']
    #allocation8 [shape = 'u8[65536]{0}', space=vmem, size = 0x10000, scoped, tag = 'input window, operand 1, single buffered']
    #allocation9 [shape = 's32[1]{0}', space=sflag, size = 0x4, scoped, tag = 'scoped memory for tpu_custom_call.1']
    #allocation10 [shape = 'u8[65536]{0}', space=vmem, size = 0x10000, scoped, tag = 'input window, operand 2, single buffered']
    #allocation11 [shape = 'u8[65536]{0}', space=vmem, size = 0x10000, scoped, tag = 'output window, operand 0, single buffered']
    %8 = vsyncpa [#allocation6], 0
    %9 = vsyncpa [#allocation9], 0
    %10 = vsyncpa [#allocation7], 0
    // Predicated region
    $region2: #{tpu_custom_call.1} parent=1 // pred_check
      _
    $region3: #{tpu_custom_call.1} parent=1 // pred_check_branch
      %12 = sbr.rel (0) target = $region5
    $region4: #{tpu_custom_call.1} parent=1 // pred_region
      %s14 = ssub.s32 2048, 2048
      %15 = vsyncadd [#allocation6], %s14
      %s16 = sshll.u32 [#allocation5], 4
      %s17 = int_to_ptr.vmem [resolvable:$true] %s16
      %22 = dma.hbm_to_vmem [thread:$0]  %s0, 2048, %s17, [#allocation6], 128, 128, 8
    $region5: #{tpu_custom_call.1} parent=1 // pred_fallthru
      _
    // Predicated region
    $region6: #{tpu_custom_call.1} parent=1 // pred_check
      _
    $region7: #{tpu_custom_call.1} parent=1 // pred_check_branch
      %24 = sbr.rel (0) target = $region9
    $region8: #{tpu_custom_call.1} parent=1 // pred_region
      %s26 = ssub.s32 2048, 2048
      %27 = vsyncadd [#allocation9], %s26
      %s28 = sshll.u32 [#allocation8], 4
      %s29 = int_to_ptr.vmem [resolvable:$true] %s28
      %34 = dma.hbm_to_vmem [thread:$0]  %s1, 2048, %s29, [#allocation9], 128, 128, 8
    $region9: #{tpu_custom_call.1} parent=1 // pred_fallthru
      _
    // Predicated region
    $region10: #{tpu_custom_call.1} parent=1 // pred_check
      _
    $region11: #{tpu_custom_call.1} parent=1 // pred_check_branch
      %36 = sbr.rel (0) target = $region13
    $region12: #{tpu_custom_call.1} parent=1 // pred_region
      %s38 = ssub.s32 2048, 2048
      %39 = vsyncadd [#allocation9], %s38
      %s40 = sshll.u32 [#allocation10], 4
      %s41 = int_to_ptr.vmem [resolvable:$true] %s40
      %46 = dma.hbm_to_vmem [thread:$0]  %s2, 2048, %s41, [#allocation9], 128, 128, 8
    $region13: #{tpu_custom_call.1} parent=1 // pred_fallthru
      _
    // Predicated region
    $region14: #{tpu_custom_call.1} parent=1 // pred_check
      _
    $region15: #{tpu_custom_call.1} parent=1 // pred_check_branch
      %48 = sbr.rel (0) target = $region17
    $region16: #{tpu_custom_call.1} parent=1 // pred_region
      %49 = dma.done [#allocation6], 2048
    $region17: #{tpu_custom_call.1} parent=1 // pred_fallthru
      _
    // Predicated region
    $region18: #{tpu_custom_call.1} parent=1 // pred_check
      _
    $region19: #{tpu_custom_call.1} parent=1 // pred_check_branch
      %51 = sbr.rel (0) target = $region21
    $region20: #{tpu_custom_call.1} parent=1 // pred_region
      %52 = dma.done [#allocation9], 2048
    $region21: #{tpu_custom_call.1} parent=1 // pred_fallthru
      _
    // Predicated region
    $region22: #{tpu_custom_call.1} parent=1 // pred_check
      _
    $region23: #{tpu_custom_call.1} parent=1 // pred_check_branch
      %54 = sbr.rel (0) target = $region25
    $region24: #{tpu_custom_call.1} parent=1 // pred_region
      %55 = dma.done [#allocation9], 2048
    $region25: #{tpu_custom_call.1} parent=1 // pred_fallthru
      _
    %p56 = scmp.eq.s32.totalorder 0, 0
    // Predicated region
    $region26: #{tpu_custom_call.1} parent=1 // pred_check
      %p57 = pneg %p56
    $region27: #{tpu_custom_call.1} parent=1 // pred_check_branch
      %59 = sbr.rel (%p57) target = $region29
    $region28: #{tpu_custom_call.1} parent=1 // pred_region
      %vm60 = vcmask 7168
      %61 = vst.msk [vmem:[#allocation2] sm:$0xff] %vm60, -inf
      %62 = vst.msk [vmem:[#allocation2 + $0x8] sm:$0xff] %vm60, -inf
      %63 = vst.msk [vmem:[#allocation2 + $0x10] sm:$0xff] %vm60, -inf
      %64 = vst.msk [vmem:[#allocation2 + $0x18] sm:$0xff] %vm60, -inf
      %65 = vst.msk [vmem:[#allocation2 + $0x20] sm:$0xff] %vm60, -inf
      %66 = vst.msk [vmem:[#allocation2 + $0x28] sm:$0xff] %vm60, -inf
      %67 = vst.msk [vmem:[#allocation2 + $0x30] sm:$0xff] %vm60, -inf
      %68 = vst.msk [vmem:[#allocation2 + $0x38] sm:$0xff] %vm60, -inf
      %69 = vst.msk [vmem:[#allocation2 + $0x40] sm:$0xff] %vm60, -inf
      %70 = vst.msk [vmem:[#allocation2 + $0x48] sm:$0xff] %vm60, -inf
      %71 = vst.msk [vmem:[#allocation2 + $0x50] sm:$0xff] %vm60, -inf
      %72 = vst.msk [vmem:[#allocation2 + $0x58] sm:$0xff] %vm60, -inf
      %73 = vst.msk [vmem:[#allocation2 + $0x60] sm:$0xff] %vm60, -inf
      %74 = vst.msk [vmem:[#allocation2 + $0x68] sm:$0xff] %vm60, -inf
      %75 = vst.msk [vmem:[#allocation2 + $0x70] sm:$0xff] %vm60, -inf
      %76 = vst.msk [vmem:[#allocation2 + $0x78] sm:$0xff] %vm60, -inf
      %77 = vst.msk [vmem:[#allocation3] sm:$0xff] %vm60, 0.0
      %78 = vst.msk [vmem:[#allocation3 + $0x8] sm:$0xff] %vm60, 0.0
      %79 = vst.msk [vmem:[#allocation3 + $0x10] sm:$0xff] %vm60, 0.0
      %80 = vst.msk [vmem:[#allocation3 + $0x18] sm:$0xff] %vm60, 0.0
      %81 = vst.msk [vmem:[#allocation3 + $0x20] sm:$0xff] %vm60, 0.0
      %82 = vst.msk [vmem:[#allocation3 + $0x28] sm:$0xff] %vm60, 0.0
      %83 = vst.msk [vmem:[#allocation3 + $0x30] sm:$0xff] %vm60, 0.0
      %84 = vst.msk [vmem:[#allocation3 + $0x38] sm:$0xff] %vm60, 0.0
      %85 = vst.msk [vmem:[#allocation3 + $0x40] sm:$0xff] %vm60, 0.0
      %86 = vst.msk [vmem:[#allocation3 + $0x48] sm:$0xff] %vm60, 0.0
      %87 = vst.msk [vmem:[#allocation3 + $0x50] sm:$0xff] %vm60, 0.0
      %88 = vst.msk [vmem:[#allocation3 + $0x58] sm:$0xff] %vm60, 0.0
      %89 = vst.msk [vmem:[#allocation3 + $0x60] sm:$0xff] %vm60, 0.0
      %90 = vst.msk [vmem:[#allocation3 + $0x68] sm:$0xff] %vm60, 0.0
      %91 = vst.msk [vmem:[#allocation3 + $0x70] sm:$0xff] %vm60, 0.0
      %92 = vst.msk [vmem:[#allocation3 + $0x78] sm:$0xff] %vm60, 0.0
      %vm93 = vcmask 261120
      %94 = vst.msk [vmem:[#allocation4] sm:$0xff] %vm93, 0.0
      %95 = vst.msk [vmem:[#allocation4 + $0x8] sm:$0xff] %vm93, 0.0
      %96 = vst.msk [vmem:[#allocation4 + $0x10] sm:$0xff] %vm93, 0.0
      %97 = vst.msk [vmem:[#allocation4 + $0x18] sm:$0xff] %vm93, 0.0
      %98 = vst.msk [vmem:[#allocation4 + $0x20] sm:$0xff] %vm93, 0.0
      %99 = vst.msk [vmem:[#allocation4 + $0x28] sm:$0xff] %vm93, 0.0
      %100 = vst.msk [vmem:[#allocation4 + $0x30] sm:$0xff] %vm93, 0.0
      %101 = vst.msk [vmem:[#allocation4 + $0x38] sm:$0xff] %vm93, 0.0
      %102 = vst.msk [vmem:[#allocation4 + $0x40] sm:$0xff] %vm93, 0.0
      %103 = vst.msk [vmem:[#allocation4 + $0x48] sm:$0xff] %vm93, 0.0
      %104 = vst.msk [vmem:[#allocation4 + $0x50] sm:$0xff] %vm93, 0.0
      %105 = vst.msk [vmem:[#allocation4 + $0x58] sm:$0xff] %vm93, 0.0
      %106 = vst.msk [vmem:[#allocation4 + $0x60] sm:$0xff] %vm93, 0.0
      %107 = vst.msk [vmem:[#allocation4 + $0x68] sm:$0xff] %vm93, 0.0
      %108 = vst.msk [vmem:[#allocation4 + $0x70] sm:$0xff] %vm93, 0.0
      %109 = vst.msk [vmem:[#allocation4 + $0x78] sm:$0xff] %vm93, 0.0
    $region29: #{tpu_custom_call.1} parent=1 // pred_fallthru
      _
    %v110 = vld [vmem:[#allocation5] sm:$0xff]
    %v111 = vld [vmem:[#allocation5 + $0x8] sm:$0xff]
    %v112 = vld [vmem:[#allocation5 + $0x10] sm:$0xff]
    %v113 = vld [vmem:[#allocation5 + $0x18] sm:$0xff]
    %v114 = vld [vmem:[#allocation5 + $0x20] sm:$0xff]
    %v115 = vld [vmem:[#allocation5 + $0x28] sm:$0xff]
    %v116 = vld [vmem:[#allocation5 + $0x30] sm:$0xff]
    %v117 = vld [vmem:[#allocation5 + $0x38] sm:$0xff]
    %v118 = vld [vmem:[#allocation5 + $0x40] sm:$0xff]
    %v119 = vld [vmem:[#allocation5 + $0x48] sm:$0xff]
    %v120 = vld [vmem:[#allocation5 + $0x50] sm:$0xff]
    %v121 = vld [vmem:[#allocation5 + $0x58] sm:$0xff]
    %v122 = vld [vmem:[#allocation5 + $0x60] sm:$0xff]
    %v123 = vld [vmem:[#allocation5 + $0x68] sm:$0xff]
    %v124 = vld [vmem:[#allocation5 + $0x70] sm:$0xff]
    %v125 = vld [vmem:[#allocation5 + $0x78] sm:$0xff]
    %v126 = vld [vmem:[#allocation8] sm:$0xff]
    %v127 = vld [vmem:[#allocation8 + $0x8] sm:$0xff]
    %v128 = vld [vmem:[#allocation8 + $0x10] sm:$0xff]
    %v129 = vld [vmem:[#allocation8 + $0x18] sm:$0xff]
    %v130 = vld [vmem:[#allocation8 + $0x20] sm:$0xff]
    %v131 = vld [vmem:[#allocation8 + $0x28] sm:$0xff]
    %v132 = vld [vmem:[#allocation8 + $0x30] sm:$0xff]
    %v133 = vld [vmem:[#allocation8 + $0x38] sm:$0xff]
    %v134 = vld [vmem:[#allocation8 + $0x40] sm:$0xff]
    %v135 = vld [vmem:[#allocation8 + $0x48] sm:$0xff]
    %v136 = vld [vmem:[#allocation8 + $0x50] sm:$0xff]
    %v137 = vld [vmem:[#allocation8 + $0x58] sm:$0xff]
    %v138 = vld [vmem:[#allocation8 + $0x60] sm:$0xff]
    %v139 = vld [vmem:[#allocation8 + $0x68] sm:$0xff]
    %v140 = vld [vmem:[#allocation8 + $0x70] sm:$0xff]
    %v141 = vld [vmem:[#allocation8 + $0x78] sm:$0xff]
    %v142 = vld [vmem:[#allocation10] sm:$0xff]
    %v143 = vld [vmem:[#allocation10 + $0x8] sm:$0xff]
    %v144 = vld [vmem:[#allocation10 + $0x10] sm:$0xff]
    %v145 = vld [vmem:[#allocation10 + $0x18] sm:$0xff]
    %v146 = vld [vmem:[#allocation10 + $0x20] sm:$0xff]
    %v147 = vld [vmem:[#allocation10 + $0x28] sm:$0xff]
    %v148 = vld [vmem:[#allocation10 + $0x30] sm:$0xff]
    %v149 = vld [vmem:[#allocation10 + $0x38] sm:$0xff]
    %v150 = vld [vmem:[#allocation10 + $0x40] sm:$0xff]
    %v151 = vld [vmem:[#allocation10 + $0x48] sm:$0xff]
    %v152 = vld [vmem:[#allocation10 + $0x50] sm:$0xff]
    %v153 = vld [vmem:[#allocation10 + $0x58] sm:$0xff]
    %v154 = vld [vmem:[#allocation10 + $0x60] sm:$0xff]
    %v155 = vld [vmem:[#allocation10 + $0x68] sm:$0xff]
    %v156 = vld [vmem:[#allocation10 + $0x70] sm:$0xff]
    %v157 = vld [vmem:[#allocation10 + $0x78] sm:$0xff]
    %v158 = vmul.f32 %v110, 0.17677669
    %v159 = vmul.f32 %v111, 0.17677669
    %v160 = vmul.f32 %v112, 0.17677669
    %v161 = vmul.f32 %v113, 0.17677669
    %v162 = vmul.f32 %v114, 0.17677669
    %v163 = vmul.f32 %v115, 0.17677669
    %v164 = vmul.f32 %v116, 0.17677669
    %v165 = vmul.f32 %v117, 0.17677669
    %v166 = vmul.f32 %v118, 0.17677669
    %v167 = vmul.f32 %v119, 0.17677669
    %v168 = vmul.f32 %v120, 0.17677669
    %v169 = vmul.f32 %v121, 0.17677669
    %v170 = vmul.f32 %v122, 0.17677669
    %v171 = vmul.f32 %v123, 0.17677669
    %v172 = vmul.f32 %v124, 0.17677669
    %v173 = vmul.f32 %v125, 0.17677669
    %vm174 = vcmask 261120
    %v176 = vsel %vm174, %v158, 0
    %v179 = vsel %vm174, %v159, 0
    %v182 = vsel %vm174, %v126, 0
    %v185 = vsel %vm174, %v127, 0
    %187 = vmatprep.subr.mxu0 0.0
    %188 = vmatpush1.xpose.msra.mxu0 0.0
    %189 = vmatprep.subr.mxu0 0.0
    %190 = vmatpush1.xpose.msra.mxu0 0.0
    %191 = vmatprep.subr.mxu0 0.0
    %192 = vmatpush1.xpose.msra.mxu0 0.0
    %193 = vmatprep.subr.mxu0 0.0
    %194 = vmatpush1.xpose.msra.mxu0 0.0
    %195 = vmatprep.subr.mxu0 0.0
    %196 = vmatpush1.xpose.msra.mxu0 0.0
    %197 = vmatprep.subr.mxu0 0.0
    %198 = vmatpush1.xpose.msra.mxu0 0.0
    %199 = vmatprep.subr.mxu0 0.0
    %200 = vmatpush1.xpose.msra.mxu0 0.0
    %201 = vmatprep.subr.mxu0 0.0
    %202 = vmatpush1.xpose.msra.mxu0 0.0
    %203 = vmatprep.subr.mxu0 0.0
    %204 = vmatpush1.xpose.msra.mxu0 0.0
    %205 = vmatprep.subr.mxu0 0.0
    %206 = vmatpush1.xpose.msra.mxu0 0.0
    %207 = vmatprep.subr.mxu0 0.0
    %208 = vmatpush1.xpose.msra.mxu0 0.0
    %209 = vmatprep.subr.mxu0 0.0
    %210 = vmatpush1.xpose.msra.mxu0 0.0
    %211 = vmatprep.subr.mxu0 0.0
    %212 = vmatpush1.xpose.msra.mxu0 0.0
    %213 = vmatprep.subr.mxu0 0.0
    %214 = vmatpush1.xpose.msra.mxu0 0.0
    %215 = vmatprep.subr.mxu0 0.0
    %216 = vmatpush1.xpose.msra.mxu0 %v185
    %217 = vmatprep.subr.mxu0 0.0
    %218 = vmatpush1.xpose.msra.mxu0 %v182
    %219 = vmatprep.subr.mxu0 0.0
    %220 = vmatpush2.xpose.msra.mxu0 0.0
    %221 = vmatprep.subr.mxu0 0.0
    %222 = vmatpush2.xpose.msra.mxu0 0.0
    %223 = vmatprep.subr.mxu0 0.0
    %224 = vmatpush2.xpose.msra.mxu0 0.0
    %225 = vmatprep.subr.mxu0 0.0
    %226 = vmatpush2.xpose.msra.mxu0 0.0
    %227 = vmatprep.subr.mxu0 0.0
    %228 = vmatpush2.xpose.msra.mxu0 0.0
    %229 = vmatprep.subr.mxu0 0.0
    %230 = vmatpush2.xpose.msra.mxu0 0.0
    %231 = vmatprep.subr.mxu0 0.0
    %232 = vmatpush2.xpose.msra.mxu0 0.0
    %233 = vmatprep.subr.mxu0 0.0
    %234 = vmatpush2.xpose.msra.mxu0 0.0
    %235 = vmatprep.subr.mxu0 0.0
    %236 = vmatpush2.xpose.msra.mxu0 0.0
    %237 = vmatprep.subr.mxu0 0.0
    %238 = vmatpush2.xpose.msra.mxu0 0.0
    %239 = vmatprep.subr.mxu0 0.0
    %240 = vmatpush2.xpose.msra.mxu0 0.0
    %241 = vmatprep.subr.mxu0 0.0
    %242 = vmatpush2.xpose.msra.mxu0 0.0
    %243 = vmatprep.subr.mxu0 0.0
    %244 = vmatpush2.xpose.msra.mxu0 0.0
    %245 = vmatprep.subr.mxu0 0.0
    %246 = vmatpush2.xpose.msra.mxu0 0.0
    %247 = vmatprep.subr.mxu0 0.0
    %248 = vmatpush2.xpose.msra.mxu0 0.0
    %249 = vmatprep.subr.mxu0 0.0
    %250 = vmatpush2.xpose.msra.mxu0 0.0
    %251 = vmatprep.mubr.f32.mxu0 0.0
    %252 = vmatmul.mubr.f32.gmra.mxu0 %v176
    %v253 = vpop.f32.mrf.mxu0
    %v254 = vadd.f32 0.0, %v253
    %v255 = vpop.f32.mrf.mxu0
    %256 = vmatprep.mubr.f32.mxu0 0.0
    %257 = vmatmul.mubr.f32.gmra.mxu0 %v179
    %v258 = vpop.f32.mrf.mxu0
    %v259 = vadd.f32 0.0, %v258
    %v260 = vpop.f32.mrf.mxu0
    %261 = vdwg.mxu0
    %v263 = vsel %vm174, %v160, 0
    %v266 = vsel %vm174, %v161, 0
    %v269 = vsel %vm174, %v128, 0
    %v272 = vsel %vm174, %v129, 0
    %274 = vmatprep.subr.mxu0 0.0
    %275 = vmatpush1.xpose.msra.mxu0 0.0
    %276 = vmatprep.subr.mxu0 0.0
    %277 = vmatpush1.xpose.msra.mxu0 0.0
    %278 = vmatprep.subr.mxu0 0.0
    %279 = vmatpush1.xpose.msra.mxu0 0.0
    %280 = vmatprep.subr.mxu0 0.0
    %281 = vmatpush1.xpose.msra.mxu0 0.0
    %282 = vmatprep.subr.mxu0 0.0
    %283 = vmatpush1.xpose.msra.mxu0 0.0
    %284 = vmatprep.subr.mxu0 0.0
    %285 = vmatpush1.xpose.msra.mxu0 0.0
    %286 = vmatprep.subr.mxu0 0.0
    %287 = vmatpush1.xpose.msra.mxu0 0.0
    %288 = vmatprep.subr.mxu0 0.0
    %289 = vmatpush1.xpose.msra.mxu0 0.0
    %290 = vmatprep.subr.mxu0 0.0
    %291 = vmatpush1.xpose.msra.mxu0 0.0
    %292 = vmatprep.subr.mxu0 0.0
    %293 = vmatpush1.xpose.msra.mxu0 0.0
    %294 = vmatprep.subr.mxu0 0.0
    %295 = vmatpush1.xpose.msra.mxu0 0.0
    %296 = vmatprep.subr.mxu0 0.0
    %297 = vmatpush1.xpose.msra.mxu0 0.0
    %298 = vmatprep.subr.mxu0 0.0
    %299 = vmatpush1.xpose.msra.mxu0 0.0
    %300 = vmatprep.subr.mxu0 0.0
    %301 = vmatpush1.xpose.msra.mxu0 0.0
    %302 = vmatprep.subr.mxu0 0.0
    %303 = vmatpush1.xpose.msra.mxu0 %v272
    %304 = vmatprep.subr.mxu0 0.0
    %305 = vmatpush1.xpose.msra.mxu0 %v269
    %306 = vmatprep.subr.mxu0 0.0
    %307 = vmatpush2.xpose.msra.mxu0 0.0
    %308 = vmatprep.subr.mxu0 0.0
    %309 = vmatpush2.xpose.msra.mxu0 0.0
    %310 = vmatprep.subr.mxu0 0.0
    %311 = vmatpush2.xpose.msra.mxu0 0.0
    %312 = vmatprep.subr.mxu0 0.0
    %313 = vmatpush2.xpose.msra.mxu0 0.0
    %314 = vmatprep.subr.mxu0 0.0
    %315 = vmatpush2.xpose.msra.mxu0 0.0
    %316 = vmatprep.subr.mxu0 0.0
    %317 = vmatpush2.xpose.msra.mxu0 0.0
    %318 = vmatprep.subr.mxu0 0.0
    %319 = vmatpush2.xpose.msra.mxu0 0.0
    %320 = vmatprep.subr.mxu0 0.0
    %321 = vmatpush2.xpose.msra.mxu0 0.0
    %322 = vmatprep.subr.mxu0 0.0
    %323 = vmatpush2.xpose.msra.mxu0 0.0
    %324 = vmatprep.subr.mxu0 0.0
    %325 = vmatpush2.xpose.msra.mxu0 0.0
    %326 = vmatprep.subr.mxu0 0.0
    %327 = vmatpush2.xpose.msra.mxu0 0.0
    %328 = vmatprep.subr.mxu0 0.0
    %329 = vmatpush2.xpose.msra.mxu0 0.0
    %330 = vmatprep.subr.mxu0 0.0
    %331 = vmatpush2.xpose.msra.mxu0 0.0
    %332 = vmatprep.subr.mxu0 0.0
    %333 = vmatpush2.xpose.msra.mxu0 0.0
    %334 = vmatprep.subr.mxu0 0.0
    %335 = vmatpush2.xpose.msra.mxu0 0.0
    %336 = vmatprep.subr.mxu0 0.0
    %337 = vmatpush2.xpose.msra.mxu0 0.0
    %338 = vmatprep.mubr.f32.mxu0 0.0
    %339 = vmatmul.mubr.f32.gmra.mxu0 %v263
    %v340 = vpop.f32.mrf.mxu0
    %v341 = vadd.f32 0.0, %v340
    %v342 = vpop.f32.mrf.mxu0
    %343 = vmatprep.mubr.f32.mxu0 0.0
    %344 = vmatmul.mubr.f32.gmra.mxu0 %v266
    %v345 = vpop.f32.mrf.mxu0
    %v346 = vadd.f32 0.0, %v345
    %v347 = vpop.f32.mrf.mxu0
    %348 = vdwg.mxu0
    %v350 = vsel %vm174, %v162, 0
    %v353 = vsel %vm174, %v163, 0
    %v356 = vsel %vm174, %v130, 0
    %v359 = vsel %vm174, %v131, 0
    %361 = vmatprep.subr.mxu0 0.0
    %362 = vmatpush1.xpose.msra.mxu0 0.0
    %363 = vmatprep.subr.mxu0 0.0
    %364 = vmatpush1.xpose.msra.mxu0 0.0
    %365 = vmatprep.subr.mxu0 0.0
    %366 = vmatpush1.xpose.msra.mxu0 0.0
    %367 = vmatprep.subr.mxu0 0.0
    %368 = vmatpush1.xpose.msra.mxu0 0.0
    %369 = vmatprep.subr.mxu0 0.0
    %370 = vmatpush1.xpose.msra.mxu0 0.0
    %371 = vmatprep.subr.mxu0 0.0
    %372 = vmatpush1.xpose.msra.mxu0 0.0
    %373 = vmatprep.subr.mxu0 0.0
    %374 = vmatpush1.xpose.msra.mxu0 0.0
    %375 = vmatprep.subr.mxu0 0.0
    %376 = vmatpush1.xpose.msra.mxu0 0.0
    %377 = vmatprep.subr.mxu0 0.0
    %378 = vmatpush1.xpose.msra.mxu0 0.0
    %379 = vmatprep.subr.mxu0 0.0
    %380 = vmatpush1.xpose.msra.mxu0 0.0
    %381 = vmatprep.subr.mxu0 0.0
    %382 = vmatpush1.xpose.msra.mxu0 0.0
    %383 = vmatprep.subr.mxu0 0.0
    %384 = vmatpush1.xpose.msra.mxu0 0.0
    %385 = vmatprep.subr.mxu0 0.0
    %386 = vmatpush1.xpose.msra.mxu0 0.0
    %387 = vmatprep.subr.mxu0 0.0
    %388 = vmatpush1.xpose.msra.mxu0 0.0
    %389 = vmatprep.subr.mxu0 0.0
    %390 = vmatpush1.xpose.msra.mxu0 %v359
    %391 = vmatprep.subr.mxu0 0.0
    %392 = vmatpush1.xpose.msra.mxu0 %v356
    %393 = vmatprep.subr.mxu0 0.0
    %394 = vmatpush2.xpose.msra.mxu0 0.0
    %395 = vmatprep.subr.mxu0 0.0
    %396 = vmatpush2.xpose.msra.mxu0 0.0
    %397 = vmatprep.subr.mxu0 0.0
    %398 = vmatpush2.xpose.msra.mxu0 0.0
    %399 = vmatprep.subr.mxu0 0.0
    %400 = vmatpush2.xpose.msra.mxu0 0.0
    %401 = vmatprep.subr.mxu0 0.0
    %402 = vmatpush2.xpose.msra.mxu0 0.0
    %403 = vmatprep.subr.mxu0 0.0
    %404 = vmatpush2.xpose.msra.mxu0 0.0
    %405 = vmatprep.subr.mxu0 0.0
    %406 = vmatpush2.xpose.msra.mxu0 0.0
    %407 = vmatprep.subr.mxu0 0.0
    %408 = vmatpush2.xpose.msra.mxu0 0.0
    %409 = vmatprep.subr.mxu0 0.0
    %410 = vmatpush2.xpose.msra.mxu0 0.0
    %411 = vmatprep.subr.mxu0 0.0
    %412 = vmatpush2.xpose.msra.mxu0 0.0
    %413 = vmatprep.subr.mxu0 0.0
    %414 = vmatpush2.xpose.msra.mxu0 0.0
    %415 = vmatprep.subr.mxu0 0.0
    %416 = vmatpush2.xpose.msra.mxu0 0.0
    %417 = vmatprep.subr.mxu0 0.0
    %418 = vmatpush2.xpose.msra.mxu0 0.0
    %419 = vmatprep.subr.mxu0 0.0
    %420 = vmatpush2.xpose.msra.mxu0 0.0
    %421 = vmatprep.subr.mxu0 0.0
    %422 = vmatpush2.xpose.msra.mxu0 0.0
    %423 = vmatprep.subr.mxu0 0.0
    %424 = vmatpush2.xpose.msra.mxu0 0.0
    %425 = vmatprep.mubr.f32.mxu0 0.0
    %426 = vmatmul.mubr.f32.gmra.mxu0 %v350
    %v427 = vpop.f32.mrf.mxu0
    %v428 = vadd.f32 0.0, %v427
    %v429 = vpop.f32.mrf.mxu0
    %430 = vmatprep.mubr.f32.mxu0 0.0
    %431 = vmatmul.mubr.f32.gmra.mxu0 %v353
    %v432 = vpop.f32.mrf.mxu0
    %v433 = vadd.f32 0.0, %v432
    %v434 = vpop.f32.mrf.mxu0
    %435 = vdwg.mxu0
    %v437 = vsel %vm174, %v164, 0
    %v440 = vsel %vm174, %v165, 0
    %v443 = vsel %vm174, %v132, 0
    %v446 = vsel %vm174, %v133, 0
    %448 = vmatprep.subr.mxu0 0.0
    %449 = vmatpush1.xpose.msra.mxu0 0.0
    %450 = vmatprep.subr.mxu0 0.0
    %451 = vmatpush1.xpose.msra.mxu0 0.0
    %452 = vmatprep.subr.mxu0 0.0
    %453 = vmatpush1.xpose.msra.mxu0 0.0
    %454 = vmatprep.subr.mxu0 0.0
    %455 = vmatpush1.xpose.msra.mxu0 0.0
    %456 = vmatprep.subr.mxu0 0.0
    %457 = vmatpush1.xpose.msra.mxu0 0.0
    %458 = vmatprep.subr.mxu0 0.0
    %459 = vmatpush1.xpose.msra.mxu0 0.0
    %460 = vmatprep.subr.mxu0 0.0
    %461 = vmatpush1.xpose.msra.mxu0 0.0
    %462 = vmatprep.subr.mxu0 0.0
    %463 = vmatpush1.xpose.msra.mxu0 0.0
    %464 = vmatprep.subr.mxu0 0.0
    %465 = vmatpush1.xpose.msra.mxu0 0.0
    %466 = vmatprep.subr.mxu0 0.0
    %467 = vmatpush1.xpose.msra.mxu0 0.0
    %468 = vmatprep.subr.mxu0 0.0
    %469 = vmatpush1.xpose.msra.mxu0 0.0
    %470 = vmatprep.subr.mxu0 0.0
    %471 = vmatpush1.xpose.msra.mxu0 0.0
    %472 = vmatprep.subr.mxu0 0.0
    %473 = vmatpush1.xpose.msra.mxu0 0.0
    %474 = vmatprep.subr.mxu0 0.0
    %475 = vmatpush1.xpose.msra.mxu0 0.0
    %476 = vmatprep.subr.mxu0 0.0
    %477 = vmatpush1.xpose.msra.mxu0 %v446
    %478 = vmatprep.subr.mxu0 0.0
    %479 = vmatpush1.xpose.msra.mxu0 %v443
    %480 = vmatprep.subr.mxu0 0.0
    %481 = vmatpush2.xpose.msra.mxu0 0.0
    %482 = vmatprep.subr.mxu0 0.0
    %483 = vmatpush2.xpose.msra.mxu0 0.0
    %484 = vmatprep.subr.mxu0 0.0
    %485 = vmatpush2.xpose.msra.mxu0 0.0
    %486 = vmatprep.subr.mxu0 0.0
    %487 = vmatpush2.xpose.msra.mxu0 0.0
    %488 = vmatprep.subr.mxu0 0.0
    %489 = vmatpush2.xpose.msra.mxu0 0.0
    %490 = vmatprep.subr.mxu0 0.0
    %491 = vmatpush2.xpose.msra.mxu0 0.0
    %492 = vmatprep.subr.mxu0 0.0
    %493 = vmatpush2.xpose.msra.mxu0 0.0
    %494 = vmatprep.subr.mxu0 0.0
    %495 = vmatpush2.xpose.msra.mxu0 0.0
    %496 = vmatprep.subr.mxu0 0.0
    %497 = vmatpush2.xpose.msra.mxu0 0.0
    %498 = vmatprep.subr.mxu0 0.0
    %499 = vmatpush2.xpose.msra.mxu0 0.0
    %500 = vmatprep.subr.mxu0 0.0
    %501 = vmatpush2.xpose.msra.mxu0 0.0
    %502 = vmatprep.subr.mxu0 0.0
    %503 = vmatpush2.xpose.msra.mxu0 0.0
    %504 = vmatprep.subr.mxu0 0.0
    %505 = vmatpush2.xpose.msra.mxu0 0.0
    %506 = vmatprep.subr.mxu0 0.0
    %507 = vmatpush2.xpose.msra.mxu0 0.0
    %508 = vmatprep.subr.mxu0 0.0
    %509 = vmatpush2.xpose.msra.mxu0 0.0
    %510 = vmatprep.subr.mxu0 0.0
    %511 = vmatpush2.xpose.msra.mxu0 0.0
    %512 = vmatprep.mubr.f32.mxu0 0.0
    %513 = vmatmul.mubr.f32.gmra.mxu0 %v437
    %v514 = vpop.f32.mrf.mxu0
    %v515 = vadd.f32 0.0, %v514
    %v516 = vpop.f32.mrf.mxu0
    %517 = vmatprep.mubr.f32.mxu0 0.0
    %518 = vmatmul.mubr.f32.gmra.mxu0 %v440
    %v519 = vpop.f32.mrf.mxu0
    %v520 = vadd.f32 0.0, %v519
    %v521 = vpop.f32.mrf.mxu0
    %522 = vdwg.mxu0
    %v524 = vsel %vm174, %v166, 0
    %v527 = vsel %vm174, %v167, 0
    %v530 = vsel %vm174, %v134, 0
    %v533 = vsel %vm174, %v135, 0
    %535 = vmatprep.subr.mxu0 0.0
    %536 = vmatpush1.xpose.msra.mxu0 0.0
    %537 = vmatprep.subr.mxu0 0.0
    %538 = vmatpush1.xpose.msra.mxu0 0.0
    %539 = vmatprep.subr.mxu0 0.0
    %540 = vmatpush1.xpose.msra.mxu0 0.0
    %541 = vmatprep.subr.mxu0 0.0
    %542 = vmatpush1.xpose.msra.mxu0 0.0
    %543 = vmatprep.subr.mxu0 0.0
    %544 = vmatpush1.xpose.msra.mxu0 0.0
    %545 = vmatprep.subr.mxu0 0.0
    %546 = vmatpush1.xpose.msra.mxu0 0.0
    %547 = vmatprep.subr.mxu0 0.0
    %548 = vmatpush1.xpose.msra.mxu0 0.0
    %549 = vmatprep.subr.mxu0 0.0
    %550 = vmatpush1.xpose.msra.mxu0 0.0
    %551 = vmatprep.subr.mxu0 0.0
    %552 = vmatpush1.xpose.msra.mxu0 0.0
    %553 = vmatprep.subr.mxu0 0.0
    %554 = vmatpush1.xpose.msra.mxu0 0.0
    %555 = vmatprep.subr.mxu0 0.0
    %556 = vmatpush1.xpose.msra.mxu0 0.0
    %557 = vmatprep.subr.mxu0 0.0
    %558 = vmatpush1.xpose.msra.mxu0 0.0
    %559 = vmatprep.subr.mxu0 0.0
    %560 = vmatpush1.xpose.msra.mxu0 0.0
    %561 = vmatprep.subr.mxu0 0.0
    %562 = vmatpush1.xpose.msra.mxu0 0.0
    %563 = vmatprep.subr.mxu0 0.0
    %564 = vmatpush1.xpose.msra.mxu0 %v533
    %565 = vmatprep.subr.mxu0 0.0
    %566 = vmatpush1.xpose.msra.mxu0 %v530
    %567 = vmatprep.subr.mxu0 0.0
    %568 = vmatpush2.xpose.msra.mxu0 0.0
    %569 = vmatprep.subr.mxu0 0.0
    %570 = vmatpush2.xpose.msra.mxu0 0.0
    %571 = vmatprep.subr.mxu0 0.0
    %572 = vmatpush2.xpose.msra.mxu0 0.0
    %573 = vmatprep.subr.mxu0 0.0
    %574 = vmatpush2.xpose.msra.mxu0 0.0
    %575 = vmatprep.subr.mxu0 0.0
    %576 = vmatpush2.xpose.msra.mxu0 0.0
    %577 = vmatprep.subr.mxu0 0.0
    %578 = vmatpush2.xpose.msra.mxu0 0.0
    %579 = vmatprep.subr.mxu0 0.0
    %580 = vmatpush2.xpose.msra.mxu0 0.0
    %581 = vmatprep.subr.mxu0 0.0
    %582 = vmatpush2.xpose.msra.mxu0 0.0
    %583 = vmatprep.subr.mxu0 0.0
    %584 = vmatpush2.xpose.msra.mxu0 0.0
    %585 = vmatprep.subr.mxu0 0.0
    %586 = vmatpush2.xpose.msra.mxu0 0.0
    %587 = vmatprep.subr.mxu0 0.0
    %588 = vmatpush2.xpose.msra.mxu0 0.0
    %589 = vmatprep.subr.mxu0 0.0
    %590 = vmatpush2.xpose.msra.mxu0 0.0
    %591 = vmatprep.subr.mxu0 0.0
    %592 = vmatpush2.xpose.msra.mxu0 0.0
    %593 = vmatprep.subr.mxu0 0.0
    %594 = vmatpush2.xpose.msra.mxu0 0.0
    %595 = vmatprep.subr.mxu0 0.0
    %596 = vmatpush2.xpose.msra.mxu0 0.0
    %597 = vmatprep.subr.mxu0 0.0
    %598 = vmatpush2.xpose.msra.mxu0 0.0
    %599 = vmatprep.mubr.f32.mxu0 0.0
    %600 = vmatmul.mubr.f32.gmra.mxu0 %v524
    %v601 = vpop.f32.mrf.mxu0
    %v602 = vadd.f32 0.0, %v601
    %v603 = vpop.f32.mrf.mxu0
    %604 = vmatprep.mubr.f32.mxu0 0.0
    %605 = vmatmul.mubr.f32.gmra.mxu0 %v527
    %v606 = vpop.f32.mrf.mxu0
    %v607 = vadd.f32 0.0, %v606
    %v608 = vpop.f32.mrf.mxu0
    %609 = vdwg.mxu0
    %v611 = vsel %vm174, %v168, 0
    %v614 = vsel %vm174, %v169, 0
    %v617 = vsel %vm174, %v136, 0
    %v620 = vsel %vm174, %v137, 0
    %622 = vmatprep.subr.mxu0 0.0
    %623 = vmatpush1.xpose.msra.mxu0 0.0
    %624 = vmatprep.subr.mxu0 0.0
    %625 = vmatpush1.xpose.msra.mxu0 0.0
    %626 = vmatprep.subr.mxu0 0.0
    %627 = vmatpush1.xpose.msra.mxu0 0.0
    %628 = vmatprep.subr.mxu0 0.0
    %629 = vmatpush1.xpose.msra.mxu0 0.0
    %630 = vmatprep.subr.mxu0 0.0
    %631 = vmatpush1.xpose.msra.mxu0 0.0
    %632 = vmatprep.subr.mxu0 0.0
    %633 = vmatpush1.xpose.msra.mxu0 0.0
    %634 = vmatprep.subr.mxu0 0.0
    %635 = vmatpush1.xpose.msra.mxu0 0.0
    %636 = vmatprep.subr.mxu0 0.0
    %637 = vmatpush1.xpose.msra.mxu0 0.0
    %638 = vmatprep.subr.mxu0 0.0
    %639 = vmatpush1.xpose.msra.mxu0 0.0
    %640 = vmatprep.subr.mxu0 0.0
    %641 = vmatpush1.xpose.msra.mxu0 0.0
    %642 = vmatprep.subr.mxu0 0.0
    %643 = vmatpush1.xpose.msra.mxu0 0.0
    %644 = vmatprep.subr.mxu0 0.0
    %645 = vmatpush1.xpose.msra.mxu0 0.0
    %646 = vmatprep.subr.mxu0 0.0
    %647 = vmatpush1.xpose.msra.mxu0 0.0
    %648 = vmatprep.subr.mxu0 0.0
    %649 = vmatpush1.xpose.msra.mxu0 0.0
    %650 = vmatprep.subr.mxu0 0.0
    %651 = vmatpush1.xpose.msra.mxu0 %v620
    %652 = vmatprep.subr.mxu0 0.0
    %653 = vmatpush1.xpose.msra.mxu0 %v617
    %654 = vmatprep.subr.mxu0 0.0
    %655 = vmatpush2.xpose.msra.mxu0 0.0
    %656 = vmatprep.subr.mxu0 0.0
    %657 = vmatpush2.xpose.msra.mxu0 0.0
    %658 = vmatprep.subr.mxu0 0.0
    %659 = vmatpush2.xpose.msra.mxu0 0.0
    %660 = vmatprep.subr.mxu0 0.0
    %661 = vmatpush2.xpose.msra.mxu0 0.0
    %662 = vmatprep.subr.mxu0 0.0
    %663 = vmatpush2.xpose.msra.mxu0 0.0
    %664 = vmatprep.subr.mxu0 0.0
    %665 = vmatpush2.xpose.msra.mxu0 0.0
    %666 = vmatprep.subr.mxu0 0.0
    %667 = vmatpush2.xpose.msra.mxu0 0.0
    %668 = vmatprep.subr.mxu0 0.0
    %669 = vmatpush2.xpose.msra.mxu0 0.0
    %670 = vmatprep.subr.mxu0 0.0
    %671 = vmatpush2.xpose.msra.mxu0 0.0
    %672 = vmatprep.subr.mxu0 0.0
    %673 = vmatpush2.xpose.msra.mxu0 0.0
    %674 = vmatprep.subr.mxu0 0.0
    %675 = vmatpush2.xpose.msra.mxu0 0.0
    %676 = vmatprep.subr.mxu0 0.0
    %677 = vmatpush2.xpose.msra.mxu0 0.0
    %678 = vmatprep.subr.mxu0 0.0
    %679 = vmatpush2.xpose.msra.mxu0 0.0
    %680 = vmatprep.subr.mxu0 0.0
    %681 = vmatpush2.xpose.msra.mxu0 0.0
    %682 = vmatprep.subr.mxu0 0.0
    %683 = vmatpush2.xpose.msra.mxu0 0.0
    %684 = vmatprep.subr.mxu0 0.0
    %685 = vmatpush2.xpose.msra.mxu0 0.0
    %686 = vmatprep.mubr.f32.mxu0 0.0
    %687 = vmatmul.mubr.f32.gmra.mxu0 %v611
    %v688 = vpop.f32.mrf.mxu0
    %v689 = vadd.f32 0.0, %v688
    %v690 = vpop.f32.mrf.mxu0
    %691 = vmatprep.mubr.f32.mxu0 0.0
    %692 = vmatmul.mubr.f32.gmra.mxu0 %v614
    %v693 = vpop.f32.mrf.mxu0
    %v694 = vadd.f32 0.0, %v693
    %v695 = vpop.f32.mrf.mxu0
    %696 = vdwg.mxu0
    %v698 = vsel %vm174, %v170, 0
    %v701 = vsel %vm174, %v171, 0
    %v704 = vsel %vm174, %v138, 0
    %v707 = vsel %vm174, %v139, 0
    %709 = vmatprep.subr.mxu0 0.0
    %710 = vmatpush1.xpose.msra.mxu0 0.0
    %711 = vmatprep.subr.mxu0 0.0
    %712 = vmatpush1.xpose.msra.mxu0 0.0
    %713 = vmatprep.subr.mxu0 0.0
    %714 = vmatpush1.xpose.msra.mxu0 0.0
    %715 = vmatprep.subr.mxu0 0.0
    %716 = vmatpush1.xpose.msra.mxu0 0.0
    %717 = vmatprep.subr.mxu0 0.0
    %718 = vmatpush1.xpose.msra.mxu0 0.0
    %719 = vmatprep.subr.mxu0 0.0
    %720 = vmatpush1.xpose.msra.mxu0 0.0
    %721 = vmatprep.subr.mxu0 0.0
    %722 = vmatpush1.xpose.msra.mxu0 0.0
    %723 = vmatprep.subr.mxu0 0.0
    %724 = vmatpush1.xpose.msra.mxu0 0.0
    %725 = vmatprep.subr.mxu0 0.0
    %726 = vmatpush1.xpose.msra.mxu0 0.0
    %727 = vmatprep.subr.mxu0 0.0
    %728 = vmatpush1.xpose.msra.mxu0 0.0
    %729 = vmatprep.subr.mxu0 0.0
    %730 = vmatpush1.xpose.msra.mxu0 0.0
    %731 = vmatprep.subr.mxu0 0.0
    %732 = vmatpush1.xpose.msra.mxu0 0.0
    %733 = vmatprep.subr.mxu0 0.0
    %734 = vmatpush1.xpose.msra.mxu0 0.0
    %735 = vmatprep.subr.mxu0 0.0
    %736 = vmatpush1.xpose.msra.mxu0 0.0
    %737 = vmatprep.subr.mxu0 0.0
    %738 = vmatpush1.xpose.msra.mxu0 %v707
    %739 = vmatprep.subr.mxu0 0.0
    %740 = vmatpush1.xpose.msra.mxu0 %v704
    %741 = vmatprep.subr.mxu0 0.0
    %742 = vmatpush2.xpose.msra.mxu0 0.0
    %743 = vmatprep.subr.mxu0 0.0
    %744 = vmatpush2.xpose.msra.mxu0 0.0
    %745 = vmatprep.subr.mxu0 0.0
    %746 = vmatpush2.xpose.msra.mxu0 0.0
    %747 = vmatprep.subr.mxu0 0.0
    %748 = vmatpush2.xpose.msra.mxu0 0.0
    %749 = vmatprep.subr.mxu0 0.0
    %750 = vmatpush2.xpose.msra.mxu0 0.0
    %751 = vmatprep.subr.mxu0 0.0
    %752 = vmatpush2.xpose.msra.mxu0 0.0
    %753 = vmatprep.subr.mxu0 0.0
    %754 = vmatpush2.xpose.msra.mxu0 0.0
    %755 = vmatprep.subr.mxu0 0.0
    %756 = vmatpush2.xpose.msra.mxu0 0.0
    %757 = vmatprep.subr.mxu0 0.0
    %758 = vmatpush2.xpose.msra.mxu0 0.0
    %759 = vmatprep.subr.mxu0 0.0
    %760 = vmatpush2.xpose.msra.mxu0 0.0
    %761 = vmatprep.subr.mxu0 0.0
    %762 = vmatpush2.xpose.msra.mxu0 0.0
    %763 = vmatprep.subr.mxu0 0.0
    %764 = vmatpush2.xpose.msra.mxu0 0.0
    %765 = vmatprep.subr.mxu0 0.0
    %766 = vmatpush2.xpose.msra.mxu0 0.0
    %767 = vmatprep.subr.mxu0 0.0
    %768 = vmatpush2.xpose.msra.mxu0 0.0
    %769 = vmatprep.subr.mxu0 0.0
    %770 = vmatpush2.xpose.msra.mxu0 0.0
    %771 = vmatprep.subr.mxu0 0.0
    %772 = vmatpush2.xpose.msra.mxu0 0.0
    %773 = vmatprep.mubr.f32.mxu0 0.0
    %774 = vmatmul.mubr.f32.gmra.mxu0 %v698
    %v775 = vpop.f32.mrf.mxu0
    %v776 = vadd.f32 0.0, %v775
    %v777 = vpop.f32.mrf.mxu0
    %778 = vmatprep.mubr.f32.mxu0 0.0
    %779 = vmatmul.mubr.f32.gmra.mxu0 %v701
    %v780 = vpop.f32.mrf.mxu0
    %v781 = vadd.f32 0.0, %v780
    %v782 = vpop.f32.mrf.mxu0
    %783 = vdwg.mxu0
    %v785 = vsel %vm174, %v172, 0
    %v788 = vsel %vm174, %v173, 0
    %v791 = vsel %vm174, %v140, 0
    %v794 = vsel %vm174, %v141, 0
    %796 = vmatprep.subr.mxu0 0.0
    %797 = vmatpush1.xpose.msra.mxu0 0.0
    %798 = vmatprep.subr.mxu0 0.0
    %799 = vmatpush1.xpose.msra.mxu0 0.0
    %800 = vmatprep.subr.mxu0 0.0
    %801 = vmatpush1.xpose.msra.mxu0 0.0
    %802 = vmatprep.subr.mxu0 0.0
    %803 = vmatpush1.xpose.msra.mxu0 0.0
    %804 = vmatprep.subr.mxu0 0.0
    %805 = vmatpush1.xpose.msra.mxu0 0.0
    %806 = vmatprep.subr.mxu0 0.0
    %807 = vmatpush1.xpose.msra.mxu0 0.0
    %808 = vmatprep.subr.mxu0 0.0
    %809 = vmatpush1.xpose.msra.mxu0 0.0
    %810 = vmatprep.subr.mxu0 0.0
    %811 = vmatpush1.xpose.msra.mxu0 0.0
    %812 = vmatprep.subr.mxu0 0.0
    %813 = vmatpush1.xpose.msra.mxu0 0.0
    %814 = vmatprep.subr.mxu0 0.0
    %815 = vmatpush1.xpose.msra.mxu0 0.0
    %816 = vmatprep.subr.mxu0 0.0
    %817 = vmatpush1.xpose.msra.mxu0 0.0
    %818 = vmatprep.subr.mxu0 0.0
    %819 = vmatpush1.xpose.msra.mxu0 0.0
    %820 = vmatprep.subr.mxu0 0.0
    %821 = vmatpush1.xpose.msra.mxu0 0.0
    %822 = vmatprep.subr.mxu0 0.0
    %823 = vmatpush1.xpose.msra.mxu0 0.0
    %824 = vmatprep.subr.mxu0 0.0
    %825 = vmatpush1.xpose.msra.mxu0 %v794
    %826 = vmatprep.subr.mxu0 0.0
    %827 = vmatpush1.xpose.msra.mxu0 %v791
    %828 = vmatprep.subr.mxu0 0.0
    %829 = vmatpush2.xpose.msra.mxu0 0.0
    %830 = vmatprep.subr.mxu0 0.0
    %831 = vmatpush2.xpose.msra.mxu0 0.0
    %832 = vmatprep.subr.mxu0 0.0
    %833 = vmatpush2.xpose.msra.mxu0 0.0
    %834 = vmatprep.subr.mxu0 0.0
    %835 = vmatpush2.xpose.msra.mxu0 0.0
    %836 = vmatprep.subr.mxu0 0.0
    %837 = vmatpush2.xpose.msra.mxu0 0.0
    %838 = vmatprep.subr.mxu0 0.0
    %839 = vmatpush2.xpose.msra.mxu0 0.0
    %840 = vmatprep.subr.mxu0 0.0
    %841 = vmatpush2.xpose.msra.mxu0 0.0
    %842 = vmatprep.subr.mxu0 0.0
    %843 = vmatpush2.xpose.msra.mxu0 0.0
    %844 = vmatprep.subr.mxu0 0.0
    %845 = vmatpush2.xpose.msra.mxu0 0.0
    %846 = vmatprep.subr.mxu0 0.0
    %847 = vmatpush2.xpose.msra.mxu0 0.0
    %848 = vmatprep.subr.mxu0 0.0
    %849 = vmatpush2.xpose.msra.mxu0 0.0
    %850 = vmatprep.subr.mxu0 0.0
    %851 = vmatpush2.xpose.msra.mxu0 0.0
    %852 = vmatprep.subr.mxu0 0.0
    %853 = vmatpush2.xpose.msra.mxu0 0.0
    %854 = vmatprep.subr.mxu0 0.0
    %855 = vmatpush2.xpose.msra.mxu0 0.0
    %856 = vmatprep.subr.mxu0 0.0
    %857 = vmatpush2.xpose.msra.mxu0 0.0
    %858 = vmatprep.subr.mxu0 0.0
    %859 = vmatpush2.xpose.msra.mxu0 0.0
    %860 = vmatprep.mubr.f32.mxu0 0.0
    %861 = vmatmul.mubr.f32.gmra.mxu0 %v785
    %v862 = vpop.f32.mrf.mxu0
    %v863 = vadd.f32 0.0, %v862
    %v864 = vpop.f32.mrf.mxu0
    %865 = vmatprep.mubr.f32.mxu0 0.0
    %866 = vmatmul.mubr.f32.gmra.mxu0 %v788
    %v867 = vpop.f32.mrf.mxu0
    %v868 = vadd.f32 0.0, %v867
    %v869 = vpop.f32.mrf.mxu0
    %870 = vdwg.mxu0
    %v871 = vld [vmem:[#allocation2] sm:$0xff]
    %v872 = vld [vmem:[#allocation2 + $0x8] sm:$0xff]
    %v873 = vld [vmem:[#allocation2 + $0x10] sm:$0xff]
    %v874 = vld [vmem:[#allocation2 + $0x18] sm:$0xff]
    %v875 = vld [vmem:[#allocation2 + $0x20] sm:$0xff]
    %v876 = vld [vmem:[#allocation2 + $0x28] sm:$0xff]
    %v877 = vld [vmem:[#allocation2 + $0x30] sm:$0xff]
    %v878 = vld [vmem:[#allocation2 + $0x38] sm:$0xff]
    %v879 = vld [vmem:[#allocation2 + $0x40] sm:$0xff]
    %v880 = vld [vmem:[#allocation2 + $0x48] sm:$0xff]
    %v881 = vld [vmem:[#allocation2 + $0x50] sm:$0xff]
    %v882 = vld [vmem:[#allocation2 + $0x58] sm:$0xff]
    %v883 = vld [vmem:[#allocation2 + $0x60] sm:$0xff]
    %v884 = vld [vmem:[#allocation2 + $0x68] sm:$0xff]
    %v885 = vld [vmem:[#allocation2 + $0x70] sm:$0xff]
    %v886 = vld [vmem:[#allocation2 + $0x78] sm:$0xff]
    %vm887 = vcmask 130048
    %v888 = vsel %vm887, %v254, -inf
    %889 = vmax.xlane.f32.xlu0 %v888
    %v890 = vpop.xlane.xlu0 %889
    %v891 = vsel %vm887, %v259, -inf
    %892 = vmax.xlane.f32.xlu0 %v891
    %v893 = vpop.xlane.xlu0 %892
    %v894 = vsel %vm887, %v341, -inf
    %895 = vmax.xlane.f32.xlu0 %v894
    %v896 = vpop.xlane.xlu0 %895
    %v897 = vsel %vm887, %v346, -inf
    %898 = vmax.xlane.f32.xlu0 %v897
    %v899 = vpop.xlane.xlu0 %898
    %v900 = vsel %vm887, %v428, -inf
    %901 = vmax.xlane.f32.xlu0 %v900
    %v902 = vpop.xlane.xlu0 %901
    %v903 = vsel %vm887, %v433, -inf
    %904 = vmax.xlane.f32.xlu0 %v903
    %v905 = vpop.xlane.xlu0 %904
    %v906 = vsel %vm887, %v515, -inf
    %907 = vmax.xlane.f32.xlu0 %v906
    %v908 = vpop.xlane.xlu0 %907
    %v909 = vsel %vm887, %v520, -inf
    %910 = vmax.xlane.f32.xlu0 %v909
    %v911 = vpop.xlane.xlu0 %910
    %v912 = vsel %vm887, %v602, -inf
    %913 = vmax.xlane.f32.xlu0 %v912
    %v914 = vpop.xlane.xlu0 %913
    %v915 = vsel %vm887, %v607, -inf
    %916 = vmax.xlane.f32.xlu0 %v915
    %v917 = vpop.xlane.xlu0 %916
    %v918 = vsel %vm887, %v689, -inf
    %919 = vmax.xlane.f32.xlu0 %v918
    %v920 = vpop.xlane.xlu0 %919
    %v921 = vsel %vm887, %v694, -inf
    %922 = vmax.xlane.f32.xlu0 %v921
    %v923 = vpop.xlane.xlu0 %922
    %v924 = vsel %vm887, %v776, -inf
    %925 = vmax.xlane.f32.xlu0 %v924
    %v926 = vpop.xlane.xlu0 %925
    %v927 = vsel %vm887, %v781, -inf
    %928 = vmax.xlane.f32.xlu0 %v927
    %v929 = vpop.xlane.xlu0 %928
    %v930 = vsel %vm887, %v863, -inf
    %931 = vmax.xlane.f32.xlu0 %v930
    %v932 = vpop.xlane.xlu0 %931
    %v933 = vsel %vm887, %v868, -inf
    %934 = vmax.xlane.f32.xlu0 %v933
    %v935 = vpop.xlane.xlu0 %934
    %v936 = vmax.f32 %v871, %v890
    %v937 = vmax.f32 %v872, %v893
    %v938 = vmax.f32 %v873, %v896
    %v939 = vmax.f32 %v874, %v899
    %v940 = vmax.f32 %v875, %v902
    %v941 = vmax.f32 %v876, %v905
    %v942 = vmax.f32 %v877, %v908
    %v943 = vmax.f32 %v878, %v911
    %v944 = vmax.f32 %v879, %v914
    %v945 = vmax.f32 %v880, %v917
    %v946 = vmax.f32 %v881, %v920
    %v947 = vmax.f32 %v882, %v923
    %v948 = vmax.f32 %v883, %v926
    %v949 = vmax.f32 %v884, %v929
    %v950 = vmax.f32 %v885, %v932
    %v951 = vmax.f32 %v886, %v935
    %v952 = vsub.f32 %v871, %v936
    %v953 = vsub.f32 %v872, %v937
    %v954 = vsub.f32 %v873, %v938
    %v955 = vsub.f32 %v874, %v939
    %v956 = vsub.f32 %v875, %v940
    %v957 = vsub.f32 %v876, %v941
    %v958 = vsub.f32 %v877, %v942
    %v959 = vsub.f32 %v878, %v943
    %v960 = vsub.f32 %v879, %v944
    %v961 = vsub.f32 %v880, %v945
    %v962 = vsub.f32 %v881, %v946
    %v963 = vsub.f32 %v882, %v947
    %v964 = vsub.f32 %v883, %v948
    %v965 = vsub.f32 %v884, %v949
    %v966 = vsub.f32 %v885, %v950
    %v967 = vsub.f32 %v886, %v951
    %v968 = vmul.f32 %v952, 1.442695
    %v969 = vpow.pop %v968
    %v970 = vmul.f32 %v953, 1.442695
    %v971 = vpow.pop %v970
    %v972 = vmul.f32 %v954, 1.442695
    %v973 = vpow.pop %v972
    %v974 = vmul.f32 %v955, 1.442695
    %v975 = vpow.pop %v974
    %v976 = vmul.f32 %v956, 1.442695
    %v977 = vpow.pop %v976
    %v978 = vmul.f32 %v957, 1.442695
    %v979 = vpow.pop %v978
    %v980 = vmul.f32 %v958, 1.442695
    %v981 = vpow.pop %v980
    %v982 = vmul.f32 %v959, 1.442695
    %v983 = vpow.pop %v982
    %v984 = vmul.f32 %v960, 1.442695
    %v985 = vpow.pop %v984
    %v986 = vmul.f32 %v961, 1.442695
    %v987 = vpow.pop %v986
    %v988 = vmul.f32 %v962, 1.442695
    %v989 = vpow.pop %v988
    %v990 = vmul.f32 %v963, 1.442695
    %v991 = vpow.pop %v990
    %v992 = vmul.f32 %v964, 1.442695
    %v993 = vpow.pop %v992
    %v994 = vmul.f32 %v965, 1.442695
    %v995 = vpow.pop %v994
    %v996 = vmul.f32 %v966, 1.442695
    %v997 = vpow.pop %v996
    %v998 = vmul.f32 %v967, 1.442695
    %v999 = vpow.pop %v998
    %1001 = vset.pattern.permute.xlu0 0
    %1002 = vperm.xlu0 %1001, %v936
    %v1003 = vpop.permute.xlu0 %1002
    %1006 = vset.pattern.permute.xlu0 0
    %1007 = vperm.xlu0 %1006, %v937
    %v1008 = vpop.permute.xlu0 %1007
    %1011 = vset.pattern.permute.xlu0 0
    %1012 = vperm.xlu0 %1011, %v938
    %v1013 = vpop.permute.xlu0 %1012
    %1016 = vset.pattern.permute.xlu0 0
    %1017 = vperm.xlu0 %1016, %v939
    %v1018 = vpop.permute.xlu0 %1017
    %1021 = vset.pattern.permute.xlu0 0
    %1022 = vperm.xlu0 %1021, %v940
    %v1023 = vpop.permute.xlu0 %1022
    %1026 = vset.pattern.permute.xlu0 0
    %1027 = vperm.xlu0 %1026, %v941
    %v1028 = vpop.permute.xlu0 %1027
    %1031 = vset.pattern.permute.xlu0 0
    %1032 = vperm.xlu0 %1031, %v942
    %v1033 = vpop.permute.xlu0 %1032
    %1036 = vset.pattern.permute.xlu0 0
    %1037 = vperm.xlu0 %1036, %v943
    %v1038 = vpop.permute.xlu0 %1037
    %1041 = vset.pattern.permute.xlu0 0
    %1042 = vperm.xlu0 %1041, %v944
    %v1043 = vpop.permute.xlu0 %1042
    %1046 = vset.pattern.permute.xlu0 0
    %1047 = vperm.xlu0 %1046, %v945
    %v1048 = vpop.permute.xlu0 %1047
    %1051 = vset.pattern.permute.xlu0 0
    %1052 = vperm.xlu0 %1051, %v946
    %v1053 = vpop.permute.xlu0 %1052
    %1056 = vset.pattern.permute.xlu0 0
    %1057 = vperm.xlu0 %1056, %v947
    %v1058 = vpop.permute.xlu0 %1057
    %1061 = vset.pattern.permute.xlu0 0
    %1062 = vperm.xlu0 %1061, %v948
    %v1063 = vpop.permute.xlu0 %1062
    %1066 = vset.pattern.permute.xlu0 0
    %1067 = vperm.xlu0 %1066, %v949
    %v1068 = vpop.permute.xlu0 %1067
    %1071 = vset.pattern.permute.xlu0 0
    %1072 = vperm.xlu0 %1071, %v950
    %v1073 = vpop.permute.xlu0 %1072
    %1076 = vset.pattern.permute.xlu0 0
    %1077 = vperm.xlu0 %1076, %v951
    %v1078 = vpop.permute.xlu0 %1077
    %v1080 = vsub.f32 %v254, %v1003
    %v1081 = vsub.f32 %v259, %v1008
    %v1082 = vsub.f32 %v341, %v1013
    %v1083 = vsub.f32 %v346, %v1018
    %v1084 = vsub.f32 %v428, %v1023
    %v1085 = vsub.f32 %v433, %v1028
    %v1086 = vsub.f32 %v515, %v1033
    %v1087 = vsub.f32 %v520, %v1038
    %v1088 = vsub.f32 %v602, %v1043
    %v1089 = vsub.f32 %v607, %v1048
    %v1090 = vsub.f32 %v689, %v1053
    %v1091 = vsub.f32 %v694, %v1058
    %v1092 = vsub.f32 %v776, %v1063
    %v1093 = vsub.f32 %v781, %v1068
    %v1094 = vsub.f32 %v863, %v1073
    %v1095 = vsub.f32 %v868, %v1078
    %v1096 = vmul.f32 %v1080, 1.442695
    %v1097 = vpow.pop %v1096
    %v1098 = vmul.f32 %v1081, 1.442695
    %v1099 = vpow.pop %v1098
    %v1100 = vmul.f32 %v1082, 1.442695
    %v1101 = vpow.pop %v1100
    %v1102 = vmul.f32 %v1083, 1.442695
    %v1103 = vpow.pop %v1102
    %v1104 = vmul.f32 %v1084, 1.442695
    %v1105 = vpow.pop %v1104
    %v1106 = vmul.f32 %v1085, 1.442695
    %v1107 = vpow.pop %v1106
    %v1108 = vmul.f32 %v1086, 1.442695
    %v1109 = vpow.pop %v1108
    %v1110 = vmul.f32 %v1087, 1.442695
    %v1111 = vpow.pop %v1110
    %v1112 = vmul.f32 %v1088, 1.442695
    %v1113 = vpow.pop %v1112
    %v1114 = vmul.f32 %v1089, 1.442695
    %v1115 = vpow.pop %v1114
    %v1116 = vmul.f32 %v1090, 1.442695
    %v1117 = vpow.pop %v1116
    %v1118 = vmul.f32 %v1091, 1.442695
    %v1119 = vpow.pop %v1118
    %v1120 = vmul.f32 %v1092, 1.442695
    %v1121 = vpow.pop %v1120
    %v1122 = vmul.f32 %v1093, 1.442695
    %v1123 = vpow.pop %v1122
    %v1124 = vmul.f32 %v1094, 1.442695
    %v1125 = vpow.pop %v1124
    %v1126 = vmul.f32 %v1095, 1.442695
    %v1127 = vpow.pop %v1126
    %v1128 = vld [vmem:[#allocation3] sm:$0xff]
    %v1129 = vld [vmem:[#allocation3 + $0x8] sm:$0xff]
    %v1130 = vld [vmem:[#allocation3 + $0x10] sm:$0xff]
    %v1131 = vld [vmem:[#allocation3 + $0x18] sm:$0xff]
    %v1132 = vld [vmem:[#allocation3 + $0x20] sm:$0xff]
    %v1133 = vld [vmem:[#allocation3 + $0x28] sm:$0xff]
    %v1134 = vld [vmem:[#allocation3 + $0x30] sm:$0xff]
    %v1135 = vld [vmem:[#allocation3 + $0x38] sm:$0xff]
    %v1136 = vld [vmem:[#allocation3 + $0x40] sm:$0xff]
    %v1137 = vld [vmem:[#allocation3 + $0x48] sm:$0xff]
    %v1138 = vld [vmem:[#allocation3 + $0x50] sm:$0xff]
    %v1139 = vld [vmem:[#allocation3 + $0x58] sm:$0xff]
    %v1140 = vld [vmem:[#allocation3 + $0x60] sm:$0xff]
    %v1141 = vld [vmem:[#allocation3 + $0x68] sm:$0xff]
    %v1142 = vld [vmem:[#allocation3 + $0x70] sm:$0xff]
    %v1143 = vld [vmem:[#allocation3 + $0x78] sm:$0xff]
    %v1144 = vmul.f32 %v969, %v1128
    %v1145 = vmul.f32 %v971, %v1129
    %v1146 = vmul.f32 %v973, %v1130
    %v1147 = vmul.f32 %v975, %v1131
    %v1148 = vmul.f32 %v977, %v1132
    %v1149 = vmul.f32 %v979, %v1133
    %v1150 = vmul.f32 %v981, %v1134
    %v1151 = vmul.f32 %v983, %v1135
    %v1152 = vmul.f32 %v985, %v1136
    %v1153 = vmul.f32 %v987, %v1137
    %v1154 = vmul.f32 %v989, %v1138
    %v1155 = vmul.f32 %v991, %v1139
    %v1156 = vmul.f32 %v993, %v1140
    %v1157 = vmul.f32 %v995, %v1141
    %v1158 = vmul.f32 %v997, %v1142
    %v1159 = vmul.f32 %v999, %v1143
    %v1160 = vsel %vm887, %v1097, 0.0
    %1161 = vadd.xlane.f32.xlu0 %v1160
    %v1162 = vpop.xlane.xlu0 %1161
    %v1163 = vsel %vm887, %v1099, 0.0
    %1164 = vadd.xlane.f32.xlu0 %v1163
    %v1165 = vpop.xlane.xlu0 %1164
    %v1166 = vsel %vm887, %v1101, 0.0
    %1167 = vadd.xlane.f32.xlu0 %v1166
    %v1168 = vpop.xlane.xlu0 %1167
    %v1169 = vsel %vm887, %v1103, 0.0
    %1170 = vadd.xlane.f32.xlu0 %v1169
    %v1171 = vpop.xlane.xlu0 %1170
    %v1172 = vsel %vm887, %v1105, 0.0
    %1173 = vadd.xlane.f32.xlu0 %v1172
    %v1174 = vpop.xlane.xlu0 %1173
    %v1175 = vsel %vm887, %v1107, 0.0
    %1176 = vadd.xlane.f32.xlu0 %v1175
    %v1177 = vpop.xlane.xlu0 %1176
    %v1178 = vsel %vm887, %v1109, 0.0
    %1179 = vadd.xlane.f32.xlu0 %v1178
    %v1180 = vpop.xlane.xlu0 %1179
    %v1181 = vsel %vm887, %v1111, 0.0
    %1182 = vadd.xlane.f32.xlu0 %v1181
    %v1183 = vpop.xlane.xlu0 %1182
    %v1184 = vsel %vm887, %v1113, 0.0
    %1185 = vadd.xlane.f32.xlu0 %v1184
    %v1186 = vpop.xlane.xlu0 %1185
    %v1187 = vsel %vm887, %v1115, 0.0
    %1188 = vadd.xlane.f32.xlu0 %v1187
    %v1189 = vpop.xlane.xlu0 %1188
    %v1190 = vsel %vm887, %v1117, 0.0
    %1191 = vadd.xlane.f32.xlu0 %v1190
    %v1192 = vpop.xlane.xlu0 %1191
    %v1193 = vsel %vm887, %v1119, 0.0
    %1194 = vadd.xlane.f32.xlu0 %v1193
    %v1195 = vpop.xlane.xlu0 %1194
    %v1196 = vsel %vm887, %v1121, 0.0
    %1197 = vadd.xlane.f32.xlu0 %v1196
    %v1198 = vpop.xlane.xlu0 %1197
    %v1199 = vsel %vm887, %v1123, 0.0
    %1200 = vadd.xlane.f32.xlu0 %v1199
    %v1201 = vpop.xlane.xlu0 %1200
    %v1202 = vsel %vm887, %v1125, 0.0
    %1203 = vadd.xlane.f32.xlu0 %v1202
    %v1204 = vpop.xlane.xlu0 %1203
    %v1205 = vsel %vm887, %v1127, 0.0
    %1206 = vadd.xlane.f32.xlu0 %v1205
    %v1207 = vpop.xlane.xlu0 %1206
    %v1208 = vadd.f32 %v1144, %v1162
    %v1209 = vadd.f32 %v1145, %v1165
    %v1210 = vadd.f32 %v1146, %v1168
    %v1211 = vadd.f32 %v1147, %v1171
    %v1212 = vadd.f32 %v1148, %v1174
    %v1213 = vadd.f32 %v1149, %v1177
    %v1214 = vadd.f32 %v1150, %v1180
    %v1215 = vadd.f32 %v1151, %v1183
    %v1216 = vadd.f32 %v1152, %v1186
    %v1217 = vadd.f32 %v1153, %v1189
    %v1218 = vadd.f32 %v1154, %v1192
    %v1219 = vadd.f32 %v1155, %v1195
    %v1220 = vadd.f32 %v1156, %v1198
    %v1221 = vadd.f32 %v1157, %v1201
    %v1222 = vadd.f32 %v1158, %v1204
    %v1223 = vadd.f32 %v1159, %v1207
    %vm1224 = vcmask 7168
    %1225 = vst.msk [vmem:[#allocation3] sm:$0xff] %vm1224, %v1208
    %1226 = vst.msk [vmem:[#allocation3 + $0x8] sm:$0xff] %vm1224, %v1209
    %1227 = vst.msk [vmem:[#allocation3 + $0x10] sm:$0xff] %vm1224, %v1210
    %1228 = vst.msk [vmem:[#allocation3 + $0x18] sm:$0xff] %vm1224, %v1211
    %1229 = vst.msk [vmem:[#allocation3 + $0x20] sm:$0xff] %vm1224, %v1212
    %1230 = vst.msk [vmem:[#allocation3 + $0x28] sm:$0xff] %vm1224, %v1213
    %1231 = vst.msk [vmem:[#allocation3 + $0x30] sm:$0xff] %vm1224, %v1214
    %1232 = vst.msk [vmem:[#allocation3 + $0x38] sm:$0xff] %vm1224, %v1215
    %1233 = vst.msk [vmem:[#allocation3 + $0x40] sm:$0xff] %vm1224, %v1216
    %1234 = vst.msk [vmem:[#allocation3 + $0x48] sm:$0xff] %vm1224, %v1217
    %1235 = vst.msk [vmem:[#allocation3 + $0x50] sm:$0xff] %vm1224, %v1218
    %1236 = vst.msk [vmem:[#allocation3 + $0x58] sm:$0xff] %vm1224, %v1219
    %1237 = vst.msk [vmem:[#allocation3 + $0x60] sm:$0xff] %vm1224, %v1220
    %1238 = vst.msk [vmem:[#allocation3 + $0x68] sm:$0xff] %vm1224, %v1221
    %1239 = vst.msk [vmem:[#allocation3 + $0x70] sm:$0xff] %vm1224, %v1222
    %1240 = vst.msk [vmem:[#allocation3 + $0x78] sm:$0xff] %vm1224, %v1223
    %v1242 = vsel %vm887, %v1097, 0
    %v1245 = vsel %vm887, %v1099, 0
    %1247 = vmatprep.subr.mxu0 0.0
    %1248 = vmatpush1.msra.mxu0 0.0
    %1249 = vmatprep.subr.mxu0 0.0
    %1250 = vmatpush1.msra.mxu0 0.0
    %1251 = vmatprep.subr.mxu0 0.0
    %1252 = vmatpush1.msra.mxu0 0.0
    %1253 = vmatprep.subr.mxu0 0.0
    %1254 = vmatpush1.msra.mxu0 0.0
    %1255 = vmatprep.subr.mxu0 0.0
    %1256 = vmatpush1.msra.mxu0 0.0
    %1257 = vmatprep.subr.mxu0 0.0
    %1258 = vmatpush1.msra.mxu0 0.0
    %1259 = vmatprep.subr.mxu0 0.0
    %1260 = vmatpush1.msra.mxu0 0.0
    %1261 = vmatprep.subr.mxu0 0.0
    %1262 = vmatpush1.msra.mxu0 0.0
    %1263 = vmatprep.subr.mxu0 0.0
    %1264 = vmatpush1.msra.mxu0 0.0
    %1265 = vmatprep.subr.mxu0 0.0
    %1266 = vmatpush1.msra.mxu0 0.0
    %1267 = vmatprep.subr.mxu0 0.0
    %1268 = vmatpush1.msra.mxu0 0.0
    %1269 = vmatprep.subr.mxu0 0.0
    %1270 = vmatpush1.msra.mxu0 0.0
    %1271 = vmatprep.subr.mxu0 0.0
    %1272 = vmatpush1.msra.mxu0 0.0
    %1273 = vmatprep.subr.mxu0 0.0
    %1274 = vmatpush1.msra.mxu0 0.0
    %1275 = vmatprep.subr.mxu0 0.0
    %1276 = vmatpush1.msra.mxu0 %v143
    %1277 = vmatprep.subr.mxu0 0.0
    %1278 = vmatpush1.msra.mxu0 %v142
    %1279 = vmatprep.subr.mxu0 0.0
    %1280 = vmatpush2.msra.mxu0 0.0
    %1281 = vmatprep.subr.mxu0 0.0
    %1282 = vmatpush2.msra.mxu0 0.0
    %1283 = vmatprep.subr.mxu0 0.0
    %1284 = vmatpush2.msra.mxu0 0.0
    %1285 = vmatprep.subr.mxu0 0.0
    %1286 = vmatpush2.msra.mxu0 0.0
    %1287 = vmatprep.subr.mxu0 0.0
    %1288 = vmatpush2.msra.mxu0 0.0
    %1289 = vmatprep.subr.mxu0 0.0
    %1290 = vmatpush2.msra.mxu0 0.0
    %1291 = vmatprep.subr.mxu0 0.0
    %1292 = vmatpush2.msra.mxu0 0.0
    %1293 = vmatprep.subr.mxu0 0.0
    %1294 = vmatpush2.msra.mxu0 0.0
    %1295 = vmatprep.subr.mxu0 0.0
    %1296 = vmatpush2.msra.mxu0 0.0
    %1297 = vmatprep.subr.mxu0 0.0
    %1298 = vmatpush2.msra.mxu0 0.0
    %1299 = vmatprep.subr.mxu0 0.0
    %1300 = vmatpush2.msra.mxu0 0.0
    %1301 = vmatprep.subr.mxu0 0.0
    %1302 = vmatpush2.msra.mxu0 0.0
    %1303 = vmatprep.subr.mxu0 0.0
    %1304 = vmatpush2.msra.mxu0 0.0
    %1305 = vmatprep.subr.mxu0 0.0
    %1306 = vmatpush2.msra.mxu0 0.0
    %1307 = vmatprep.subr.mxu0 0.0
    %1308 = vmatpush2.msra.mxu0 0.0
    %1309 = vmatprep.subr.mxu0 0.0
    %1310 = vmatpush2.msra.mxu0 0.0
    %1311 = vmatprep.mubr.f32.mxu0 0.0
    %1312 = vmatmul.mubr.f32.gmra.mxu0 %v1242
    %v1313 = vpop.f32.mrf.mxu0
    %v1314 = vadd.f32 0.0, %v1313
    %v1315 = vpop.f32.mrf.mxu0
    %1316 = vmatprep.mubr.f32.mxu0 0.0
    %1317 = vmatmul.mubr.f32.gmra.mxu0 %v1245
    %v1318 = vpop.f32.mrf.mxu0
    %v1319 = vadd.f32 0.0, %v1318
    %v1320 = vpop.f32.mrf.mxu0
    %1321 = vdwg.mxu0
    %v1323 = vsel %vm887, %v1101, 0
    %v1326 = vsel %vm887, %v1103, 0
    %1328 = vmatprep.subr.mxu0 0.0
    %1329 = vmatpush1.msra.mxu0 0.0
    %1330 = vmatprep.subr.mxu0 0.0
    %1331 = vmatpush1.msra.mxu0 0.0
    %1332 = vmatprep.subr.mxu0 0.0
    %1333 = vmatpush1.msra.mxu0 0.0
    %1334 = vmatprep.subr.mxu0 0.0
    %1335 = vmatpush1.msra.mxu0 0.0
    %1336 = vmatprep.subr.mxu0 0.0
    %1337 = vmatpush1.msra.mxu0 0.0
    %1338 = vmatprep.subr.mxu0 0.0
    %1339 = vmatpush1.msra.mxu0 0.0
    %1340 = vmatprep.subr.mxu0 0.0
    %1341 = vmatpush1.msra.mxu0 0.0
    %1342 = vmatprep.subr.mxu0 0.0
    %1343 = vmatpush1.msra.mxu0 0.0
    %1344 = vmatprep.subr.mxu0 0.0
    %1345 = vmatpush1.msra.mxu0 0.0
    %1346 = vmatprep.subr.mxu0 0.0
    %1347 = vmatpush1.msra.mxu0 0.0
    %1348 = vmatprep.subr.mxu0 0.0
    %1349 = vmatpush1.msra.mxu0 0.0
    %1350 = vmatprep.subr.mxu0 0.0
    %1351 = vmatpush1.msra.mxu0 0.0
    %1352 = vmatprep.subr.mxu0 0.0
    %1353 = vmatpush1.msra.mxu0 0.0
    %1354 = vmatprep.subr.mxu0 0.0
    %1355 = vmatpush1.msra.mxu0 0.0
    %1356 = vmatprep.subr.mxu0 0.0
    %1357 = vmatpush1.msra.mxu0 %v145
    %1358 = vmatprep.subr.mxu0 0.0
    %1359 = vmatpush1.msra.mxu0 %v144
    %1360 = vmatprep.subr.mxu0 0.0
    %1361 = vmatpush2.msra.mxu0 0.0
    %1362 = vmatprep.subr.mxu0 0.0
    %1363 = vmatpush2.msra.mxu0 0.0
    %1364 = vmatprep.subr.mxu0 0.0
    %1365 = vmatpush2.msra.mxu0 0.0
    %1366 = vmatprep.subr.mxu0 0.0
    %1367 = vmatpush2.msra.mxu0 0.0
    %1368 = vmatprep.subr.mxu0 0.0
    %1369 = vmatpush2.msra.mxu0 0.0
    %1370 = vmatprep.subr.mxu0 0.0
    %1371 = vmatpush2.msra.mxu0 0.0
    %1372 = vmatprep.subr.mxu0 0.0
    %1373 = vmatpush2.msra.mxu0 0.0
    %1374 = vmatprep.subr.mxu0 0.0
    %1375 = vmatpush2.msra.mxu0 0.0
    %1376 = vmatprep.subr.mxu0 0.0
    %1377 = vmatpush2.msra.mxu0 0.0
    %1378 = vmatprep.subr.mxu0 0.0
    %1379 = vmatpush2.msra.mxu0 0.0
    %1380 = vmatprep.subr.mxu0 0.0
    %1381 = vmatpush2.msra.mxu0 0.0
    %1382 = vmatprep.subr.mxu0 0.0
    %1383 = vmatpush2.msra.mxu0 0.0
    %1384 = vmatprep.subr.mxu0 0.0
    %1385 = vmatpush2.msra.mxu0 0.0
    %1386 = vmatprep.subr.mxu0 0.0
    %1387 = vmatpush2.msra.mxu0 0.0
    %1388 = vmatprep.subr.mxu0 0.0
    %1389 = vmatpush2.msra.mxu0 0.0
    %1390 = vmatprep.subr.mxu0 0.0
    %1391 = vmatpush2.msra.mxu0 0.0
    %1392 = vmatprep.mubr.f32.mxu0 0.0
    %1393 = vmatmul.mubr.f32.gmra.mxu0 %v1323
    %v1394 = vpop.f32.mrf.mxu0
    %v1395 = vadd.f32 0.0, %v1394
    %v1396 = vpop.f32.mrf.mxu0
    %1397 = vmatprep.mubr.f32.mxu0 0.0
    %1398 = vmatmul.mubr.f32.gmra.mxu0 %v1326
    %v1399 = vpop.f32.mrf.mxu0
    %v1400 = vadd.f32 0.0, %v1399
    %v1401 = vpop.f32.mrf.mxu0
    %1402 = vdwg.mxu0
    %v1404 = vsel %vm887, %v1105, 0
    %v1407 = vsel %vm887, %v1107, 0
    %1409 = vmatprep.subr.mxu0 0.0
    %1410 = vmatpush1.msra.mxu0 0.0
    %1411 = vmatprep.subr.mxu0 0.0
    %1412 = vmatpush1.msra.mxu0 0.0
    %1413 = vmatprep.subr.mxu0 0.0
    %1414 = vmatpush1.msra.mxu0 0.0
    %1415 = vmatprep.subr.mxu0 0.0
    %1416 = vmatpush1.msra.mxu0 0.0
    %1417 = vmatprep.subr.mxu0 0.0
    %1418 = vmatpush1.msra.mxu0 0.0
    %1419 = vmatprep.subr.mxu0 0.0
    %1420 = vmatpush1.msra.mxu0 0.0
    %1421 = vmatprep.subr.mxu0 0.0
    %1422 = vmatpush1.msra.mxu0 0.0
    %1423 = vmatprep.subr.mxu0 0.0
    %1424 = vmatpush1.msra.mxu0 0.0
    %1425 = vmatprep.subr.mxu0 0.0
    %1426 = vmatpush1.msra.mxu0 0.0
    %1427 = vmatprep.subr.mxu0 0.0
    %1428 = vmatpush1.msra.mxu0 0.0
    %1429 = vmatprep.subr.mxu0 0.0
    %1430 = vmatpush1.msra.mxu0 0.0
    %1431 = vmatprep.subr.mxu0 0.0
    %1432 = vmatpush1.msra.mxu0 0.0
    %1433 = vmatprep.subr.mxu0 0.0
    %1434 = vmatpush1.msra.mxu0 0.0
    %1435 = vmatprep.subr.mxu0 0.0
    %1436 = vmatpush1.msra.mxu0 0.0
    %1437 = vmatprep.subr.mxu0 0.0
    %1438 = vmatpush1.msra.mxu0 %v147
    %1439 = vmatprep.subr.mxu0 0.0
    %1440 = vmatpush1.msra.mxu0 %v146
    %1441 = vmatprep.subr.mxu0 0.0
    %1442 = vmatpush2.msra.mxu0 0.0
    %1443 = vmatprep.subr.mxu0 0.0
    %1444 = vmatpush2.msra.mxu0 0.0
    %1445 = vmatprep.subr.mxu0 0.0
    %1446 = vmatpush2.msra.mxu0 0.0
    %1447 = vmatprep.subr.mxu0 0.0
    %1448 = vmatpush2.msra.mxu0 0.0
    %1449 = vmatprep.subr.mxu0 0.0
    %1450 = vmatpush2.msra.mxu0 0.0
    %1451 = vmatprep.subr.mxu0 0.0
    %1452 = vmatpush2.msra.mxu0 0.0
    %1453 = vmatprep.subr.mxu0 0.0
    %1454 = vmatpush2.msra.mxu0 0.0
    %1455 = vmatprep.subr.mxu0 0.0
    %1456 = vmatpush2.msra.mxu0 0.0
    %1457 = vmatprep.subr.mxu0 0.0
    %1458 = vmatpush2.msra.mxu0 0.0
    %1459 = vmatprep.subr.mxu0 0.0
    %1460 = vmatpush2.msra.mxu0 0.0
    %1461 = vmatprep.subr.mxu0 0.0
    %1462 = vmatpush2.msra.mxu0 0.0
    %1463 = vmatprep.subr.mxu0 0.0
    %1464 = vmatpush2.msra.mxu0 0.0
    %1465 = vmatprep.subr.mxu0 0.0
    %1466 = vmatpush2.msra.mxu0 0.0
    %1467 = vmatprep.subr.mxu0 0.0
    %1468 = vmatpush2.msra.mxu0 0.0
    %1469 = vmatprep.subr.mxu0 0.0
    %1470 = vmatpush2.msra.mxu0 0.0
    %1471 = vmatprep.subr.mxu0 0.0
    %1472 = vmatpush2.msra.mxu0 0.0
    %1473 = vmatprep.mubr.f32.mxu0 0.0
    %1474 = vmatmul.mubr.f32.gmra.mxu0 %v1404
    %v1475 = vpop.f32.mrf.mxu0
    %v1476 = vadd.f32 0.0, %v1475
    %v1477 = vpop.f32.mrf.mxu0
    %1478 = vmatprep.mubr.f32.mxu0 0.0
    %1479 = vmatmul.mubr.f32.gmra.mxu0 %v1407
    %v1480 = vpop.f32.mrf.mxu0
    %v1481 = vadd.f32 0.0, %v1480
    %v1482 = vpop.f32.mrf.mxu0
    %1483 = vdwg.mxu0
    %v1485 = vsel %vm887, %v1109, 0
    %v1488 = vsel %vm887, %v1111, 0
    %1490 = vmatprep.subr.mxu0 0.0
    %1491 = vmatpush1.msra.mxu0 0.0
    %1492 = vmatprep.subr.mxu0 0.0
    %1493 = vmatpush1.msra.mxu0 0.0
    %1494 = vmatprep.subr.mxu0 0.0
    %1495 = vmatpush1.msra.mxu0 0.0
    %1496 = vmatprep.subr.mxu0 0.0
    %1497 = vmatpush1.msra.mxu0 0.0
    %1498 = vmatprep.subr.mxu0 0.0
    %1499 = vmatpush1.msra.mxu0 0.0
    %1500 = vmatprep.subr.mxu0 0.0
    %1501 = vmatpush1.msra.mxu0 0.0
    %1502 = vmatprep.subr.mxu0 0.0
    %1503 = vmatpush1.msra.mxu0 0.0
    %1504 = vmatprep.subr.mxu0 0.0
    %1505 = vmatpush1.msra.mxu0 0.0
    %1506 = vmatprep.subr.mxu0 0.0
    %1507 = vmatpush1.msra.mxu0 0.0
    %1508 = vmatprep.subr.mxu0 0.0
    %1509 = vmatpush1.msra.mxu0 0.0
    %1510 = vmatprep.subr.mxu0 0.0
    %1511 = vmatpush1.msra.mxu0 0.0
    %1512 = vmatprep.subr.mxu0 0.0
    %1513 = vmatpush1.msra.mxu0 0.0
    %1514 = vmatprep.subr.mxu0 0.0
    %1515 = vmatpush1.msra.mxu0 0.0
    %1516 = vmatprep.subr.mxu0 0.0
    %1517 = vmatpush1.msra.mxu0 0.0
    %1518 = vmatprep.subr.mxu0 0.0
    %1519 = vmatpush1.msra.mxu0 %v149
    %1520 = vmatprep.subr.mxu0 0.0
    %1521 = vmatpush1.msra.mxu0 %v148
    %1522 = vmatprep.subr.mxu0 0.0
    %1523 = vmatpush2.msra.mxu0 0.0
    %1524 = vmatprep.subr.mxu0 0.0
    %1525 = vmatpush2.msra.mxu0 0.0
    %1526 = vmatprep.subr.mxu0 0.0
    %1527 = vmatpush2.msra.mxu0 0.0
    %1528 = vmatprep.subr.mxu0 0.0
    %1529 = vmatpush2.msra.mxu0 0.0
    %1530 = vmatprep.subr.mxu0 0.0
    %1531 = vmatpush2.msra.mxu0 0.0
    %1532 = vmatprep.subr.mxu0 0.0
    %1533 = vmatpush2.msra.mxu0 0.0
    %1534 = vmatprep.subr.mxu0 0.0
    %1535 = vmatpush2.msra.mxu0 0.0
    %1536 = vmatprep.subr.mxu0 0.0
    %1537 = vmatpush2.msra.mxu0 0.0
    %1538 = vmatprep.subr.mxu0 0.0
    %1539 = vmatpush2.msra.mxu0 0.0
    %1540 = vmatprep.subr.mxu0 0.0
    %1541 = vmatpush2.msra.mxu0 0.0
    %1542 = vmatprep.subr.mxu0 0.0
    %1543 = vmatpush2.msra.mxu0 0.0
    %1544 = vmatprep.subr.mxu0 0.0
    %1545 = vmatpush2.msra.mxu0 0.0
    %1546 = vmatprep.subr.mxu0 0.0
    %1547 = vmatpush2.msra.mxu0 0.0
    %1548 = vmatprep.subr.mxu0 0.0
    %1549 = vmatpush2.msra.mxu0 0.0
    %1550 = vmatprep.subr.mxu0 0.0
    %1551 = vmatpush2.msra.mxu0 0.0
    %1552 = vmatprep.subr.mxu0 0.0
    %1553 = vmatpush2.msra.mxu0 0.0
    %1554 = vmatprep.mubr.f32.mxu0 0.0
    %1555 = vmatmul.mubr.f32.gmra.mxu0 %v1485
    %v1556 = vpop.f32.mrf.mxu0
    %v1557 = vadd.f32 0.0, %v1556
    %v1558 = vpop.f32.mrf.mxu0
    %1559 = vmatprep.mubr.f32.mxu0 0.0
    %1560 = vmatmul.mubr.f32.gmra.mxu0 %v1488
    %v1561 = vpop.f32.mrf.mxu0
    %v1562 = vadd.f32 0.0, %v1561
    %v1563 = vpop.f32.mrf.mxu0
    %1564 = vdwg.mxu0
    %v1566 = vsel %vm887, %v1113, 0
    %v1569 = vsel %vm887, %v1115, 0
    %1571 = vmatprep.subr.mxu0 0.0
    %1572 = vmatpush1.msra.mxu0 0.0
    %1573 = vmatprep.subr.mxu0 0.0
    %1574 = vmatpush1.msra.mxu0 0.0
    %1575 = vmatprep.subr.mxu0 0.0
    %1576 = vmatpush1.msra.mxu0 0.0
    %1577 = vmatprep.subr.mxu0 0.0
    %1578 = vmatpush1.msra.mxu0 0.0
    %1579 = vmatprep.subr.mxu0 0.0
    %1580 = vmatpush1.msra.mxu0 0.0
    %1581 = vmatprep.subr.mxu0 0.0
    %1582 = vmatpush1.msra.mxu0 0.0
    %1583 = vmatprep.subr.mxu0 0.0
    %1584 = vmatpush1.msra.mxu0 0.0
    %1585 = vmatprep.subr.mxu0 0.0
    %1586 = vmatpush1.msra.mxu0 0.0
    %1587 = vmatprep.subr.mxu0 0.0
    %1588 = vmatpush1.msra.mxu0 0.0
    %1589 = vmatprep.subr.mxu0 0.0
    %1590 = vmatpush1.msra.mxu0 0.0
    %1591 = vmatprep.subr.mxu0 0.0
    %1592 = vmatpush1.msra.mxu0 0.0
    %1593 = vmatprep.subr.mxu0 0.0
    %1594 = vmatpush1.msra.mxu0 0.0
    %1595 = vmatprep.subr.mxu0 0.0
    %1596 = vmatpush1.msra.mxu0 0.0
    %1597 = vmatprep.subr.mxu0 0.0
    %1598 = vmatpush1.msra.mxu0 0.0
    %1599 = vmatprep.subr.mxu0 0.0
    %1600 = vmatpush1.msra.mxu0 %v151
    %1601 = vmatprep.subr.mxu0 0.0
    %1602 = vmatpush1.msra.mxu0 %v150
    %1603 = vmatprep.subr.mxu0 0.0
    %1604 = vmatpush2.msra.mxu0 0.0
    %1605 = vmatprep.subr.mxu0 0.0
    %1606 = vmatpush2.msra.mxu0 0.0
    %1607 = vmatprep.subr.mxu0 0.0
    %1608 = vmatpush2.msra.mxu0 0.0
    %1609 = vmatprep.subr.mxu0 0.0
    %1610 = vmatpush2.msra.mxu0 0.0
    %1611 = vmatprep.subr.mxu0 0.0
    %1612 = vmatpush2.msra.mxu0 0.0
    %1613 = vmatprep.subr.mxu0 0.0
    %1614 = vmatpush2.msra.mxu0 0.0
    %1615 = vmatprep.subr.mxu0 0.0
    %1616 = vmatpush2.msra.mxu0 0.0
    %1617 = vmatprep.subr.mxu0 0.0
    %1618 = vmatpush2.msra.mxu0 0.0
    %1619 = vmatprep.subr.mxu0 0.0
    %1620 = vmatpush2.msra.mxu0 0.0
    %1621 = vmatprep.subr.mxu0 0.0
    %1622 = vmatpush2.msra.mxu0 0.0
    %1623 = vmatprep.subr.mxu0 0.0
    %1624 = vmatpush2.msra.mxu0 0.0
    %1625 = vmatprep.subr.mxu0 0.0
    %1626 = vmatpush2.msra.mxu0 0.0
    %1627 = vmatprep.subr.mxu0 0.0
    %1628 = vmatpush2.msra.mxu0 0.0
    %1629 = vmatprep.subr.mxu0 0.0
    %1630 = vmatpush2.msra.mxu0 0.0
    %1631 = vmatprep.subr.mxu0 0.0
    %1632 = vmatpush2.msra.mxu0 0.0
    %1633 = vmatprep.subr.mxu0 0.0
    %1634 = vmatpush2.msra.mxu0 0.0
    %1635 = vmatprep.mubr.f32.mxu0 0.0
    %1636 = vmatmul.mubr.f32.gmra.mxu0 %v1566
    %v1637 = vpop.f32.mrf.mxu0
    %v1638 = vadd.f32 0.0, %v1637
    %v1639 = vpop.f32.mrf.mxu0
    %1640 = vmatprep.mubr.f32.mxu0 0.0
    %1641 = vmatmul.mubr.f32.gmra.mxu0 %v1569
    %v1642 = vpop.f32.mrf.mxu0
    %v1643 = vadd.f32 0.0, %v1642
    %v1644 = vpop.f32.mrf.mxu0
    %1645 = vdwg.mxu0
    %v1647 = vsel %vm887, %v1117, 0
    %v1650 = vsel %vm887, %v1119, 0
    %1652 = vmatprep.subr.mxu0 0.0
    %1653 = vmatpush1.msra.mxu0 0.0
    %1654 = vmatprep.subr.mxu0 0.0
    %1655 = vmatpush1.msra.mxu0 0.0
    %1656 = vmatprep.subr.mxu0 0.0
    %1657 = vmatpush1.msra.mxu0 0.0
    %1658 = vmatprep.subr.mxu0 0.0
    %1659 = vmatpush1.msra.mxu0 0.0
    %1660 = vmatprep.subr.mxu0 0.0
    %1661 = vmatpush1.msra.mxu0 0.0
    %1662 = vmatprep.subr.mxu0 0.0
    %1663 = vmatpush1.msra.mxu0 0.0
    %1664 = vmatprep.subr.mxu0 0.0
    %1665 = vmatpush1.msra.mxu0 0.0
    %1666 = vmatprep.subr.mxu0 0.0
    %1667 = vmatpush1.msra.mxu0 0.0
    %1668 = vmatprep.subr.mxu0 0.0
    %1669 = vmatpush1.msra.mxu0 0.0
    %1670 = vmatprep.subr.mxu0 0.0
    %1671 = vmatpush1.msra.mxu0 0.0
    %1672 = vmatprep.subr.mxu0 0.0
    %1673 = vmatpush1.msra.mxu0 0.0
    %1674 = vmatprep.subr.mxu0 0.0
    %1675 = vmatpush1.msra.mxu0 0.0
    %1676 = vmatprep.subr.mxu0 0.0
    %1677 = vmatpush1.msra.mxu0 0.0
    %1678 = vmatprep.subr.mxu0 0.0
    %1679 = vmatpush1.msra.mxu0 0.0
    %1680 = vmatprep.subr.mxu0 0.0
    %1681 = vmatpush1.msra.mxu0 %v153
    %1682 = vmatprep.subr.mxu0 0.0
    %1683 = vmatpush1.msra.mxu0 %v152
    %1684 = vmatprep.subr.mxu0 0.0
    %1685 = vmatpush2.msra.mxu0 0.0
    %1686 = vmatprep.subr.mxu0 0.0
    %1687 = vmatpush2.msra.mxu0 0.0
    %1688 = vmatprep.subr.mxu0 0.0
    %1689 = vmatpush2.msra.mxu0 0.0
    %1690 = vmatprep.subr.mxu0 0.0
    %1691 = vmatpush2.msra.mxu0 0.0
    %1692 = vmatprep.subr.mxu0 0.0
    %1693 = vmatpush2.msra.mxu0 0.0
    %1694 = vmatprep.subr.mxu0 0.0
    %1695 = vmatpush2.msra.mxu0 0.0
    %1696 = vmatprep.subr.mxu0 0.0
    %1697 = vmatpush2.msra.mxu0 0.0
    %1698 = vmatprep.subr.mxu0 0.0
    %1699 = vmatpush2.msra.mxu0 0.0
    %1700 = vmatprep.subr.mxu0 0.0
    %1701 = vmatpush2.msra.mxu0 0.0
    %1702 = vmatprep.subr.mxu0 0.0
    %1703 = vmatpush2.msra.mxu0 0.0
    %1704 = vmatprep.subr.mxu0 0.0
    %1705 = vmatpush2.msra.mxu0 0.0
    %1706 = vmatprep.subr.mxu0 0.0
    %1707 = vmatpush2.msra.mxu0 0.0
    %1708 = vmatprep.subr.mxu0 0.0
    %1709 = vmatpush2.msra.mxu0 0.0
    %1710 = vmatprep.subr.mxu0 0.0
    %1711 = vmatpush2.msra.mxu0 0.0
    %1712 = vmatprep.subr.mxu0 0.0
    %1713 = vmatpush2.msra.mxu0 0.0
    %1714 = vmatprep.subr.mxu0 0.0
    %1715 = vmatpush2.msra.mxu0 0.0
    %1716 = vmatprep.mubr.f32.mxu0 0.0
    %1717 = vmatmul.mubr.f32.gmra.mxu0 %v1647
    %v1718 = vpop.f32.mrf.mxu0
    %v1719 = vadd.f32 0.0, %v1718
    %v1720 = vpop.f32.mrf.mxu0
    %1721 = vmatprep.mubr.f32.mxu0 0.0
    %1722 = vmatmul.mubr.f32.gmra.mxu0 %v1650
    %v1723 = vpop.f32.mrf.mxu0
    %v1724 = vadd.f32 0.0, %v1723
    %v1725 = vpop.f32.mrf.mxu0
    %1726 = vdwg.mxu0
    %v1728 = vsel %vm887, %v1121, 0
    %v1731 = vsel %vm887, %v1123, 0
    %1733 = vmatprep.subr.mxu0 0.0
    %1734 = vmatpush1.msra.mxu0 0.0
    %1735 = vmatprep.subr.mxu0 0.0
    %1736 = vmatpush1.msra.mxu0 0.0
    %1737 = vmatprep.subr.mxu0 0.0
    %1738 = vmatpush1.msra.mxu0 0.0
    %1739 = vmatprep.subr.mxu0 0.0
    %1740 = vmatpush1.msra.mxu0 0.0
    %1741 = vmatprep.subr.mxu0 0.0
    %1742 = vmatpush1.msra.mxu0 0.0
    %1743 = vmatprep.subr.mxu0 0.0
    %1744 = vmatpush1.msra.mxu0 0.0
    %1745 = vmatprep.subr.mxu0 0.0
    %1746 = vmatpush1.msra.mxu0 0.0
    %1747 = vmatprep.subr.mxu0 0.0
    %1748 = vmatpush1.msra.mxu0 0.0
    %1749 = vmatprep.subr.mxu0 0.0
    %1750 = vmatpush1.msra.mxu0 0.0
    %1751 = vmatprep.subr.mxu0 0.0
    %1752 = vmatpush1.msra.mxu0 0.0
    %1753 = vmatprep.subr.mxu0 0.0
    %1754 = vmatpush1.msra.mxu0 0.0
    %1755 = vmatprep.subr.mxu0 0.0
    %1756 = vmatpush1.msra.mxu0 0.0
    %1757 = vmatprep.subr.mxu0 0.0
    %1758 = vmatpush1.msra.mxu0 0.0
    %1759 = vmatprep.subr.mxu0 0.0
    %1760 = vmatpush1.msra.mxu0 0.0
    %1761 = vmatprep.subr.mxu0 0.0
    %1762 = vmatpush1.msra.mxu0 %v155
    %1763 = vmatprep.subr.mxu0 0.0
    %1764 = vmatpush1.msra.mxu0 %v154
    %1765 = vmatprep.subr.mxu0 0.0
    %1766 = vmatpush2.msra.mxu0 0.0
    %1767 = vmatprep.subr.mxu0 0.0
    %1768 = vmatpush2.msra.mxu0 0.0
    %1769 = vmatprep.subr.mxu0 0.0
    %1770 = vmatpush2.msra.mxu0 0.0
    %1771 = vmatprep.subr.mxu0 0.0
    %1772 = vmatpush2.msra.mxu0 0.0
    %1773 = vmatprep.subr.mxu0 0.0
    %1774 = vmatpush2.msra.mxu0 0.0
    %1775 = vmatprep.subr.mxu0 0.0
    %1776 = vmatpush2.msra.mxu0 0.0
    %1777 = vmatprep.subr.mxu0 0.0
    %1778 = vmatpush2.msra.mxu0 0.0
    %1779 = vmatprep.subr.mxu0 0.0
    %1780 = vmatpush2.msra.mxu0 0.0
    %1781 = vmatprep.subr.mxu0 0.0
    %1782 = vmatpush2.msra.mxu0 0.0
    %1783 = vmatprep.subr.mxu0 0.0
    %1784 = vmatpush2.msra.mxu0 0.0
    %1785 = vmatprep.subr.mxu0 0.0
    %1786 = vmatpush2.msra.mxu0 0.0
    %1787 = vmatprep.subr.mxu0 0.0
    %1788 = vmatpush2.msra.mxu0 0.0
    %1789 = vmatprep.subr.mxu0 0.0
    %1790 = vmatpush2.msra.mxu0 0.0
    %1791 = vmatprep.subr.mxu0 0.0
    %1792 = vmatpush2.msra.mxu0 0.0
    %1793 = vmatprep.subr.mxu0 0.0
    %1794 = vmatpush2.msra.mxu0 0.0
    %1795 = vmatprep.subr.mxu0 0.0
    %1796 = vmatpush2.msra.mxu0 0.0
    %1797 = vmatprep.mubr.f32.mxu0 0.0
    %1798 = vmatmul.mubr.f32.gmra.mxu0 %v1728
    %v1799 = vpop.f32.mrf.mxu0
    %v1800 = vadd.f32 0.0, %v1799
    %v1801 = vpop.f32.mrf.mxu0
    %1802 = vmatprep.mubr.f32.mxu0 0.0
    %1803 = vmatmul.mubr.f32.gmra.mxu0 %v1731
    %v1804 = vpop.f32.mrf.mxu0
    %v1805 = vadd.f32 0.0, %v1804
    %v1806 = vpop.f32.mrf.mxu0
    %1807 = vdwg.mxu0
    %v1809 = vsel %vm887, %v1125, 0
    %v1812 = vsel %vm887, %v1127, 0
    %1814 = vmatprep.subr.mxu0 0.0
    %1815 = vmatpush1.msra.mxu0 0.0
    %1816 = vmatprep.subr.mxu0 0.0
    %1817 = vmatpush1.msra.mxu0 0.0
    %1818 = vmatprep.subr.mxu0 0.0
    %1819 = vmatpush1.msra.mxu0 0.0
    %1820 = vmatprep.subr.mxu0 0.0
    %1821 = vmatpush1.msra.mxu0 0.0
    %1822 = vmatprep.subr.mxu0 0.0
    %1823 = vmatpush1.msra.mxu0 0.0
    %1824 = vmatprep.subr.mxu0 0.0
    %1825 = vmatpush1.msra.mxu0 0.0
    %1826 = vmatprep.subr.mxu0 0.0
    %1827 = vmatpush1.msra.mxu0 0.0
    %1828 = vmatprep.subr.mxu0 0.0
    %1829 = vmatpush1.msra.mxu0 0.0
    %1830 = vmatprep.subr.mxu0 0.0
    %1831 = vmatpush1.msra.mxu0 0.0
    %1832 = vmatprep.subr.mxu0 0.0
    %1833 = vmatpush1.msra.mxu0 0.0
    %1834 = vmatprep.subr.mxu0 0.0
    %1835 = vmatpush1.msra.mxu0 0.0
    %1836 = vmatprep.subr.mxu0 0.0
    %1837 = vmatpush1.msra.mxu0 0.0
    %1838 = vmatprep.subr.mxu0 0.0
    %1839 = vmatpush1.msra.mxu0 0.0
    %1840 = vmatprep.subr.mxu0 0.0
    %1841 = vmatpush1.msra.mxu0 0.0
    %1842 = vmatprep.subr.mxu0 0.0
    %1843 = vmatpush1.msra.mxu0 %v157
    %1844 = vmatprep.subr.mxu0 0.0
    %1845 = vmatpush1.msra.mxu0 %v156
    %1846 = vmatprep.subr.mxu0 0.0
    %1847 = vmatpush2.msra.mxu0 0.0
    %1848 = vmatprep.subr.mxu0 0.0
    %1849 = vmatpush2.msra.mxu0 0.0
    %1850 = vmatprep.subr.mxu0 0.0
    %1851 = vmatpush2.msra.mxu0 0.0
    %1852 = vmatprep.subr.mxu0 0.0
    %1853 = vmatpush2.msra.mxu0 0.0
    %1854 = vmatprep.subr.mxu0 0.0
    %1855 = vmatpush2.msra.mxu0 0.0
    %1856 = vmatprep.subr.mxu0 0.0
    %1857 = vmatpush2.msra.mxu0 0.0
    %1858 = vmatprep.subr.mxu0 0.0
    %1859 = vmatpush2.msra.mxu0 0.0
    %1860 = vmatprep.subr.mxu0 0.0
    %1861 = vmatpush2.msra.mxu0 0.0
    %1862 = vmatprep.subr.mxu0 0.0
    %1863 = vmatpush2.msra.mxu0 0.0
    %1864 = vmatprep.subr.mxu0 0.0
    %1865 = vmatpush2.msra.mxu0 0.0
    %1866 = vmatprep.subr.mxu0 0.0
    %1867 = vmatpush2.msra.mxu0 0.0
    %1868 = vmatprep.subr.mxu0 0.0
    %1869 = vmatpush2.msra.mxu0 0.0
    %1870 = vmatprep.subr.mxu0 0.0
    %1871 = vmatpush2.msra.mxu0 0.0
    %1872 = vmatprep.subr.mxu0 0.0
    %1873 = vmatpush2.msra.mxu0 0.0
    %1874 = vmatprep.subr.mxu0 0.0
    %1875 = vmatpush2.msra.mxu0 0.0
    %1876 = vmatprep.subr.mxu0 0.0
    %1877 = vmatpush2.msra.mxu0 0.0
    %1878 = vmatprep.mubr.f32.mxu0 0.0
    %1879 = vmatmul.mubr.f32.gmra.mxu0 %v1809
    %v1880 = vpop.f32.mrf.mxu0
    %v1881 = vadd.f32 0.0, %v1880
    %v1882 = vpop.f32.mrf.mxu0
    %1883 = vmatprep.mubr.f32.mxu0 0.0
    %1884 = vmatmul.mubr.f32.gmra.mxu0 %v1812
    %v1885 = vpop.f32.mrf.mxu0
    %v1886 = vadd.f32 0.0, %v1885
    %v1887 = vpop.f32.mrf.mxu0
    %1888 = vdwg.mxu0
    %v1889 = vld [vmem:[#allocation4] sm:$0xff]
    %v1890 = vld [vmem:[#allocation4 + $0x8] sm:$0xff]
    %v1891 = vld [vmem:[#allocation4 + $0x10] sm:$0xff]
    %v1892 = vld [vmem:[#allocation4 + $0x18] sm:$0xff]
    %v1893 = vld [vmem:[#allocation4 + $0x20] sm:$0xff]
    %v1894 = vld [vmem:[#allocation4 + $0x28] sm:$0xff]
    %v1895 = vld [vmem:[#allocation4 + $0x30] sm:$0xff]
    %v1896 = vld [vmem:[#allocation4 + $0x38] sm:$0xff]
    %v1897 = vld [vmem:[#allocation4 + $0x40] sm:$0xff]
    %v1898 = vld [vmem:[#allocation4 + $0x48] sm:$0xff]
    %v1899 = vld [vmem:[#allocation4 + $0x50] sm:$0xff]
    %v1900 = vld [vmem:[#allocation4 + $0x58] sm:$0xff]
    %v1901 = vld [vmem:[#allocation4 + $0x60] sm:$0xff]
    %v1902 = vld [vmem:[#allocation4 + $0x68] sm:$0xff]
    %v1903 = vld [vmem:[#allocation4 + $0x70] sm:$0xff]
    %v1904 = vld [vmem:[#allocation4 + $0x78] sm:$0xff]
    %1906 = vset.pattern.permute.xlu0 0
    %1907 = vperm.xlu0 %1906, %v969
    %v1908 = vpop.permute.xlu0 %1907
    %1911 = vset.pattern.permute.xlu0 0
    %1912 = vperm.xlu0 %1911, %v971
    %v1913 = vpop.permute.xlu0 %1912
    %1916 = vset.pattern.permute.xlu0 0
    %1917 = vperm.xlu0 %1916, %v973
    %v1918 = vpop.permute.xlu0 %1917
    %1921 = vset.pattern.permute.xlu0 0
    %1922 = vperm.xlu0 %1921, %v975
    %v1923 = vpop.permute.xlu0 %1922
    %1926 = vset.pattern.permute.xlu0 0
    %1927 = vperm.xlu0 %1926, %v977
    %v1928 = vpop.permute.xlu0 %1927
    %1931 = vset.pattern.permute.xlu0 0
    %1932 = vperm.xlu0 %1931, %v979
    %v1933 = vpop.permute.xlu0 %1932
    %1936 = vset.pattern.permute.xlu0 0
    %1937 = vperm.xlu0 %1936, %v981
    %v1938 = vpop.permute.xlu0 %1937
    %1941 = vset.pattern.permute.xlu0 0
    %1942 = vperm.xlu0 %1941, %v983
    %v1943 = vpop.permute.xlu0 %1942
    %1946 = vset.pattern.permute.xlu0 0
    %1947 = vperm.xlu0 %1946, %v985
    %v1948 = vpop.permute.xlu0 %1947
    %1951 = vset.pattern.permute.xlu0 0
    %1952 = vperm.xlu0 %1951, %v987
    %v1953 = vpop.permute.xlu0 %1952
    %1956 = vset.pattern.permute.xlu0 0
    %1957 = vperm.xlu0 %1956, %v989
    %v1958 = vpop.permute.xlu0 %1957
    %1961 = vset.pattern.permute.xlu0 0
    %1962 = vperm.xlu0 %1961, %v991
    %v1963 = vpop.permute.xlu0 %1962
    %1966 = vset.pattern.permute.xlu0 0
    %1967 = vperm.xlu0 %1966, %v993
    %v1968 = vpop.permute.xlu0 %1967
    %1971 = vset.pattern.permute.xlu0 0
    %1972 = vperm.xlu0 %1971, %v995
    %v1973 = vpop.permute.xlu0 %1972
    %1976 = vset.pattern.permute.xlu0 0
    %1977 = vperm.xlu0 %1976, %v997
    %v1978 = vpop.permute.xlu0 %1977
    %1981 = vset.pattern.permute.xlu0 0
    %1982 = vperm.xlu0 %1981, %v999
    %v1983 = vpop.permute.xlu0 %1982
    %v1985 = vmul.f32 %v1908, %v1889
    %v1986 = vmul.f32 %v1913, %v1890
    %v1987 = vmul.f32 %v1918, %v1891
    %v1988 = vmul.f32 %v1923, %v1892
    %v1989 = vmul.f32 %v1928, %v1893
    %v1990 = vmul.f32 %v1933, %v1894
    %v1991 = vmul.f32 %v1938, %v1895
    %v1992 = vmul.f32 %v1943, %v1896
    %v1993 = vmul.f32 %v1948, %v1897
    %v1994 = vmul.f32 %v1953, %v1898
    %v1995 = vmul.f32 %v1958, %v1899
    %v1996 = vmul.f32 %v1963, %v1900
    %v1997 = vmul.f32 %v1968, %v1901
    %v1998 = vmul.f32 %v1973, %v1902
    %v1999 = vmul.f32 %v1978, %v1903
    %v2000 = vmul.f32 %v1983, %v1904
    %v2001 = vadd.f32 %v1985, %v1314
    %v2002 = vadd.f32 %v1986, %v1319
    %v2003 = vadd.f32 %v1987, %v1395
    %v2004 = vadd.f32 %v1988, %v1400
    %v2005 = vadd.f32 %v1989, %v1476
    %v2006 = vadd.f32 %v1990, %v1481
    %v2007 = vadd.f32 %v1991, %v1557
    %v2008 = vadd.f32 %v1992, %v1562
    %v2009 = vadd.f32 %v1993, %v1638
    %v2010 = vadd.f32 %v1994, %v1643
    %v2011 = vadd.f32 %v1995, %v1719
    %v2012 = vadd.f32 %v1996, %v1724
    %v2013 = vadd.f32 %v1997, %v1800
    %v2014 = vadd.f32 %v1998, %v1805
    %v2015 = vadd.f32 %v1999, %v1881
    %v2016 = vadd.f32 %v2000, %v1886
    %2017 = vst.msk [vmem:[#allocation4] sm:$0xff] %vm174, %v2001
    %2018 = vst.msk [vmem:[#allocation4 + $0x8] sm:$0xff] %vm174, %v2002
    %2019 = vst.msk [vmem:[#allocation4 + $0x10] sm:$0xff] %vm174, %v2003
    %2020 = vst.msk [vmem:[#allocation4 + $0x18] sm:$0xff] %vm174, %v2004
    %2021 = vst.msk [vmem:[#allocation4 + $0x20] sm:$0xff] %vm174, %v2005
    %2022 = vst.msk [vmem:[#allocation4 + $0x28] sm:$0xff] %vm174, %v2006
    %2023 = vst.msk [vmem:[#allocation4 + $0x30] sm:$0xff] %vm174, %v2007
    %2024 = vst.msk [vmem:[#allocation4 + $0x38] sm:$0xff] %vm174, %v2008
    %2025 = vst.msk [vmem:[#allocation4 + $0x40] sm:$0xff] %vm174, %v2009
    %2026 = vst.msk [vmem:[#allocation4 + $0x48] sm:$0xff] %vm174, %v2010
    %2027 = vst.msk [vmem:[#allocation4 + $0x50] sm:$0xff] %vm174, %v2011
    %2028 = vst.msk [vmem:[#allocation4 + $0x58] sm:$0xff] %vm174, %v2012
    %2029 = vst.msk [vmem:[#allocation4 + $0x60] sm:$0xff] %vm174, %v2013
    %2030 = vst.msk [vmem:[#allocation4 + $0x68] sm:$0xff] %vm174, %v2014
    %2031 = vst.msk [vmem:[#allocation4 + $0x70] sm:$0xff] %vm174, %v2015
    %2032 = vst.msk [vmem:[#allocation4 + $0x78] sm:$0xff] %vm174, %v2016
    %2033 = vst.msk [vmem:[#allocation2] sm:$0xff] %vm1224, %v936
    %2034 = vst.msk [vmem:[#allocation2 + $0x8] sm:$0xff] %vm1224, %v937
    %2035 = vst.msk [vmem:[#allocation2 + $0x10] sm:$0xff] %vm1224, %v938
    %2036 = vst.msk [vmem:[#allocation2 + $0x18] sm:$0xff] %vm1224, %v939
    %2037 = vst.msk [vmem:[#allocation2 + $0x20] sm:$0xff] %vm1224, %v940
    %2038 = vst.msk [vmem:[#allocation2 + $0x28] sm:$0xff] %vm1224, %v941
    %2039 = vst.msk [vmem:[#allocation2 + $0x30] sm:$0xff] %vm1224, %v942
    %2040 = vst.msk [vmem:[#allocation2 + $0x38] sm:$0xff] %vm1224, %v943
    %2041 = vst.msk [vmem:[#allocation2 + $0x40] sm:$0xff] %vm1224, %v944
    %2042 = vst.msk [vmem:[#allocation2 + $0x48] sm:$0xff] %vm1224, %v945
    %2043 = vst.msk [vmem:[#allocation2 + $0x50] sm:$0xff] %vm1224, %v946
    %2044 = vst.msk [vmem:[#allocation2 + $0x58] sm:$0xff] %vm1224, %v947
    %2045 = vst.msk [vmem:[#allocation2 + $0x60] sm:$0xff] %vm1224, %v948
    %2046 = vst.msk [vmem:[#allocation2 + $0x68] sm:$0xff] %vm1224, %v949
    %2047 = vst.msk [vmem:[#allocation2 + $0x70] sm:$0xff] %vm1224, %v950
    %2048 = vst.msk [vmem:[#allocation2 + $0x78] sm:$0xff] %vm1224, %v951
    // Predicated region
    $region30: #{tpu_custom_call.1} parent=1 // pred_check
      %p2049 = pneg %p56
    $region31: #{tpu_custom_call.1} parent=1 // pred_check_branch
      %2051 = sbr.rel (%p2049) target = $region33
    $region32: #{tpu_custom_call.1} parent=1 // pred_region
      %v2052 = vld [vmem:[#allocation3] sm:$0xff]
      %v2053 = vld [vmem:[#allocation3 + $0x8] sm:$0xff]
      %v2054 = vld [vmem:[#allocation3 + $0x10] sm:$0xff]
      %v2055 = vld [vmem:[#allocation3 + $0x18] sm:$0xff]
      %v2056 = vld [vmem:[#allocation3 + $0x20] sm:$0xff]
      %v2057 = vld [vmem:[#allocation3 + $0x28] sm:$0xff]
      %v2058 = vld [vmem:[#allocation3 + $0x30] sm:$0xff]
      %v2059 = vld [vmem:[#allocation3 + $0x38] sm:$0xff]
      %v2060 = vld [vmem:[#allocation3 + $0x40] sm:$0xff]
      %v2061 = vld [vmem:[#allocation3 + $0x48] sm:$0xff]
      %v2062 = vld [vmem:[#allocation3 + $0x50] sm:$0xff]
      %v2063 = vld [vmem:[#allocation3 + $0x58] sm:$0xff]
      %v2064 = vld [vmem:[#allocation3 + $0x60] sm:$0xff]
      %v2065 = vld [vmem:[#allocation3 + $0x68] sm:$0xff]
      %v2066 = vld [vmem:[#allocation3 + $0x70] sm:$0xff]
      %v2067 = vld [vmem:[#allocation3 + $0x78] sm:$0xff]
      %v2068 = vrcp.pop %v2052
      %v2069 = vrcp.pop %v2053
      %v2070 = vrcp.pop %v2054
      %v2071 = vrcp.pop %v2055
      %v2072 = vrcp.pop %v2056
      %v2073 = vrcp.pop %v2057
      %v2074 = vrcp.pop %v2058
      %v2075 = vrcp.pop %v2059
      %v2076 = vrcp.pop %v2060
      %v2077 = vrcp.pop %v2061
      %v2078 = vrcp.pop %v2062
      %v2079 = vrcp.pop %v2063
      %v2080 = vrcp.pop %v2064
      %v2081 = vrcp.pop %v2065
      %v2082 = vrcp.pop %v2066
      %v2083 = vrcp.pop %v2067
      %v2084 = vld [vmem:[#allocation4] sm:$0xff]
      %v2085 = vld [vmem:[#allocation4 + $0x8] sm:$0xff]
      %v2086 = vld [vmem:[#allocation4 + $0x10] sm:$0xff]
      %v2087 = vld [vmem:[#allocation4 + $0x18] sm:$0xff]
      %v2088 = vld [vmem:[#allocation4 + $0x20] sm:$0xff]
      %v2089 = vld [vmem:[#allocation4 + $0x28] sm:$0xff]
      %v2090 = vld [vmem:[#allocation4 + $0x30] sm:$0xff]
      %v2091 = vld [vmem:[#allocation4 + $0x38] sm:$0xff]
      %v2092 = vld [vmem:[#allocation4 + $0x40] sm:$0xff]
      %v2093 = vld [vmem:[#allocation4 + $0x48] sm:$0xff]
      %v2094 = vld [vmem:[#allocation4 + $0x50] sm:$0xff]
      %v2095 = vld [vmem:[#allocation4 + $0x58] sm:$0xff]
      %v2096 = vld [vmem:[#allocation4 + $0x60] sm:$0xff]
      %v2097 = vld [vmem:[#allocation4 + $0x68] sm:$0xff]
      %v2098 = vld [vmem:[#allocation4 + $0x70] sm:$0xff]
      %v2099 = vld [vmem:[#allocation4 + $0x78] sm:$0xff]
      %2101 = vset.pattern.permute.xlu0 0
      %2102 = vperm.xlu0 %2101, %v2068
      %v2103 = vpop.permute.xlu0 %2102
      %2106 = vset.pattern.permute.xlu0 0
      %2107 = vperm.xlu0 %2106, %v2069
      %v2108 = vpop.permute.xlu0 %2107
      %2111 = vset.pattern.permute.xlu0 0
      %2112 = vperm.xlu0 %2111, %v2070
      %v2113 = vpop.permute.xlu0 %2112
      %2116 = vset.pattern.permute.xlu0 0
      %2117 = vperm.xlu0 %2116, %v2071
      %v2118 = vpop.permute.xlu0 %2117
      %2121 = vset.pattern.permute.xlu0 0
      %2122 = vperm.xlu0 %2121, %v2072
      %v2123 = vpop.permute.xlu0 %2122
      %2126 = vset.pattern.permute.xlu0 0
      %2127 = vperm.xlu0 %2126, %v2073
      %v2128 = vpop.permute.xlu0 %2127
      %2131 = vset.pattern.permute.xlu0 0
      %2132 = vperm.xlu0 %2131, %v2074
      %v2133 = vpop.permute.xlu0 %2132
      %2136 = vset.pattern.permute.xlu0 0
      %2137 = vperm.xlu0 %2136, %v2075
      %v2138 = vpop.permute.xlu0 %2137
      %2141 = vset.pattern.permute.xlu0 0
      %2142 = vperm.xlu0 %2141, %v2076
      %v2143 = vpop.permute.xlu0 %2142
      %2146 = vset.pattern.permute.xlu0 0
      %2147 = vperm.xlu0 %2146, %v2077
      %v2148 = vpop.permute.xlu0 %2147
      %2151 = vset.pattern.permute.xlu0 0
      %2152 = vperm.xlu0 %2151, %v2078
      %v2153 = vpop.permute.xlu0 %2152
      %2156 = vset.pattern.permute.xlu0 0
      %2157 = vperm.xlu0 %2156, %v2079
      %v2158 = vpop.permute.xlu0 %2157
      %2161 = vset.pattern.permute.xlu0 0
      %2162 = vperm.xlu0 %2161, %v2080
      %v2163 = vpop.permute.xlu0 %2162
      %2166 = vset.pattern.permute.xlu0 0
      %2167 = vperm.xlu0 %2166, %v2081
      %v2168 = vpop.permute.xlu0 %2167
      %2171 = vset.pattern.permute.xlu0 0
      %2172 = vperm.xlu0 %2171, %v2082
      %v2173 = vpop.permute.xlu0 %2172
      %2176 = vset.pattern.permute.xlu0 0
      %2177 = vperm.xlu0 %2176, %v2083
      %v2178 = vpop.permute.xlu0 %2177
      %v2180 = vmul.f32 %v2084, %v2103
      %v2181 = vmul.f32 %v2085, %v2108
      %v2182 = vmul.f32 %v2086, %v2113
      %v2183 = vmul.f32 %v2087, %v2118
      %v2184 = vmul.f32 %v2088, %v2123
      %v2185 = vmul.f32 %v2089, %v2128
      %v2186 = vmul.f32 %v2090, %v2133
      %v2187 = vmul.f32 %v2091, %v2138
      %v2188 = vmul.f32 %v2092, %v2143
      %v2189 = vmul.f32 %v2093, %v2148
      %v2190 = vmul.f32 %v2094, %v2153
      %v2191 = vmul.f32 %v2095, %v2158
      %v2192 = vmul.f32 %v2096, %v2163
      %v2193 = vmul.f32 %v2097, %v2168
      %v2194 = vmul.f32 %v2098, %v2173
      %v2195 = vmul.f32 %v2099, %v2178
      %2196 = vst.msk [vmem:[#allocation11] sm:$0xff] %vm174, %v2180
      %2197 = vst.msk [vmem:[#allocation11 + $0x8] sm:$0xff] %vm174, %v2181
      %2198 = vst.msk [vmem:[#allocation11 + $0x10] sm:$0xff] %vm174, %v2182
      %2199 = vst.msk [vmem:[#allocation11 + $0x18] sm:$0xff] %vm174, %v2183
      %2200 = vst.msk [vmem:[#allocation11 + $0x20] sm:$0xff] %vm174, %v2184
      %2201 = vst.msk [vmem:[#allocation11 + $0x28] sm:$0xff] %vm174, %v2185
      %2202 = vst.msk [vmem:[#allocation11 + $0x30] sm:$0xff] %vm174, %v2186
      %2203 = vst.msk [vmem:[#allocation11 + $0x38] sm:$0xff] %vm174, %v2187
      %2204 = vst.msk [vmem:[#allocation11 + $0x40] sm:$0xff] %vm174, %v2188
      %2205 = vst.msk [vmem:[#allocation11 + $0x48] sm:$0xff] %vm174, %v2189
      %2206 = vst.msk [vmem:[#allocation11 + $0x50] sm:$0xff] %vm174, %v2190
      %2207 = vst.msk [vmem:[#allocation11 + $0x58] sm:$0xff] %vm174, %v2191
      %2208 = vst.msk [vmem:[#allocation11 + $0x60] sm:$0xff] %vm174, %v2192
      %2209 = vst.msk [vmem:[#allocation11 + $0x68] sm:$0xff] %vm174, %v2193
      %2210 = vst.msk [vmem:[#allocation11 + $0x70] sm:$0xff] %vm174, %v2194
      %2211 = vst.msk [vmem:[#allocation11 + $0x78] sm:$0xff] %vm174, %v2195
    $region33: #{tpu_custom_call.1} parent=1 // pred_fallthru
      _
    // Predicated region
    $region34: #{tpu_custom_call.1} parent=1 // pred_check
      _
    $region35: #{tpu_custom_call.1} parent=1 // pred_check_branch
      %2213 = sbr.rel (0) target = $region37
    $region36: #{tpu_custom_call.1} parent=1 // pred_region
      %s2215 = ssub.s32 2048, 2048
      %2216 = vsyncadd [#allocation7], %s2215
      %s2217 = sshll.u32 [#allocation11], 4
      %s2218 = int_to_ptr.vmem [resolvable:$true] %s2217
      %2223 = dma.vmem_to_hbm [thread:$0]  %s2218, 2048, %s3, [#allocation7], 128, 128, 8
    $region37: #{tpu_custom_call.1} parent=1 // pred_fallthru
      _
    // Predicated region
    $region38: #{tpu_custom_call.1} parent=1 // pred_check
      _
    $region39: #{tpu_custom_call.1} parent=1 // pred_check_branch
      %2225 = sbr.rel (0) target = $region41
    $region40: #{tpu_custom_call.1} parent=1 // pred_region
      %2226 = dma.done [#allocation7], 2048
    $region41: #{tpu_custom_call.1} parent=1 // pred_fallthru
      _
    %2227 = vsyncpa [#allocation6], 1
    %2228 = vsyncpa [#allocation9], 1
    %2229 = vsyncpa [#allocation7], 1

</llo_original>
